<compile_context>
chip_gen: v6e
topology: v6e:2x2x1
jax: 0.10.0
libtpu: 0.0.40
codegen_flags: <defaults>
</compile_context>

<pallas_src>
import math

import jax
import jax.numpy as jnp
from jax.experimental import pallas as pl

# ---------------- small config consistent with NAF defaults -----------------
GRID_C, GRID_H, GRID_W = 32, 4, 8            # feature_grid = [C, H, W]
LAYER_CHANNELS = (64, 64, 32)                # backbone channels
IDX_DIM = 64                                 # PosEncoder embed size
DECODER_CHANNELS = (128, 128, 128)           # decoder channels
SCENE_X, SCENE_Y = 5.0, 3.0
WAVE_LENGTH = 256
L = WAVE_LENGTH // 2                         # half-spectrum length = 128
B = 2
DIN = LAYER_CHANNELS[-1] + IDX_DIM           # 96 = decoder input channels


# ------------------------------ Pallas kernel --------------------------------
def naf_kernel(x0_ref, pe_ref,
               bw0, bb0, bw1, bb1, bw2, bb2,
               dw0_bb, dw0_pe, db0, dw1, db1, dw2, db2,
               hw_t, hb_t,
               o_ref):
    f32 = jnp.float32

    # ---- backbone: [B, 2*GRID_C] -> [B, 32]; post-ReLU residual where shapes
    #      match (64->64, 64->64), final 64->32 has none (mirrors PyTorch check).
    x = x0_ref[...]                                                       # [B, 64]
    h = jnp.maximum(jnp.dot(x, bw0[...], preferred_element_type=f32) + bb0[...], 0.0) + x
    h = jnp.maximum(jnp.dot(h, bw1[...], preferred_element_type=f32) + bb1[...], 0.0) + h
    bb = jnp.maximum(jnp.dot(h, bw2[...], preferred_element_type=f32) + bb2[...], 0.0)  # [B, 32]

    # ---- decoder layer 0, algebraically split (xin never materialized):
    #      xin = concat(bb bcast over L, pe)  =>  xin@W0 = bb@W0[:32] + pe@W0[32:]
    bb_part = jnp.dot(bb, dw0_bb[...], preferred_element_type=f32) + db0[...]   # [B, 128]
    pe_part = jnp.dot(pe_ref[...], dw0_pe[...], preferred_element_type=f32)     # [L, 128]
    # statically unrolled over B=2: stack per-point slabs along the sublane axis
    h = jnp.concatenate(
        [jnp.maximum(pe_part + bb_part[b:b + 1, :], 0.0) for b in range(B)],
        axis=0)                                                                  # [B*L, 128]

    # ---- decoder layers 1..2 (128->128, post-ReLU residual) on [256, 128] ----
    h = jnp.maximum(jnp.dot(h, dw1[...], preferred_element_type=f32) + db1[...], 0.0) + h
    h = jnp.maximum(jnp.dot(h, dw2[...], preferred_element_type=f32) + db2[...], 0.0) + h

    # ---- fused real/imag heads, lane-dense output [2, B*L] -------------------
    # row 0 = real, row 1 = imag; column j = b*L + l.  Contract hidden dims of
    # both operands directly (no explicit transpose of the [256,128] slab).
    out = jnp.einsum('oh,nh->on', hw_t[...], h, preferred_element_type=f32)
    o_ref[...] = out + hb_t[...]


def run_naf(x0, p):
    # Single grid step; all weights + activations < 1 MiB, staged once in VMEM.
    return pl.pallas_call(
        naf_kernel,
        out_shape=jax.ShapeDtypeStruct((2, B * L), jnp.float32),
    )(x0, p['pos_emb'],
      p['bb_w0'], p['bb_b0'], p['bb_w1'], p['bb_b1'], p['bb_w2'], p['bb_b2'],
      p['dec_w0_bb'], p['dec_w0_pe'], p['dec_b0'],
      p['dec_w1'], p['dec_b1'], p['dec_w2'], p['dec_b2'],
      p['head_w_t'], p['head_b_t'])


# ------------------------------- plain-JAX glue -------------------------------
def grid_sample_points(grid, coords):
    # Bilinear F.grid_sample, align_corners=True (as in the PyTorch call),
    # padding_mode='zeros', for a [B, 1, 1, 2] query grid.
    # grid: [C, H, W]; coords: [B, 2] in [-1, 1]; coords[:,0]->W, coords[:,1]->H.
    C, H, W = grid.shape
    x = (coords[:, 0] + 1.0) * 0.5 * (W - 1)
    y = (coords[:, 1] + 1.0) * 0.5 * (H - 1)
    x0 = jnp.floor(x); y0 = jnp.floor(y)
    x1 = x0 + 1.0;     y1 = y0 + 1.0
    wx1 = x - x0; wx0 = 1.0 - wx1
    wy1 = y - y0; wy0 = 1.0 - wy1

    def corner(ix, iy):
        inb = (ix >= 0) & (ix <= W - 1) & (iy >= 0) & (iy <= H - 1)
        ixc = jnp.clip(ix, 0, W - 1).astype(jnp.int32)
        iyc = jnp.clip(iy, 0, H - 1).astype(jnp.int32)
        vals = grid[:, iyc, ixc]                      # [C, B]
        return jnp.where(inb[None, :], vals, 0.0)

    out = (corner(x0, y0) * (wx0 * wy0)[None]
           + corner(x1, y0) * (wx1 * wy0)[None]
           + corner(x0, y1) * (wx0 * wy1)[None]
           + corner(x1, y1) * (wx1 * wy1)[None])
    return out.T                                      # [B, C]


def pos_encode(positions, embed_size):
    # TODO(synk): PosEncoder source was not provided; using the standard
    # sinusoidal positional encoding with output width = each_input_embed_size.
    half = embed_size // 2
    k = jnp.arange(half, dtype=jnp.float32)
    freqs = jnp.exp(-math.log(10000.0) * (2.0 * k) / embed_size)   # [half]
    ang = positions.astype(jnp.float32) * freqs[None, :]           # [L, half]
    return jnp.concatenate([jnp.sin(ang), jnp.cos(ang)], axis=-1)  # [L, embed]


def naf_forward(params, input_posA, input_posB):
    scene = jnp.array([SCENE_X, SCENE_Y], jnp.float32)
    cond_c = input_posA[..., :2] / scene * 2.0 - 1.0
    tgt_c = input_posB[..., :2] / scene * 2.0 - 1.0

    cond_f = grid_sample_points(params['feature_grid'], cond_c)    # [B, C]
    tgt_f = grid_sample_points(params['feature_grid'], tgt_c)      # [B, C]
    x0 = jnp.concatenate([cond_f, tgt_f], axis=-1)                 # [B, 2C]

    ri = run_naf(x0, params)                                       # [2, B*L]
    real = ri[0].reshape(B, L)
    imag = ri[1].reshape(B, L)

    # use_class=False, activation='None' -> straight to complex spectrum,
    # mirrored exactly as torch.hstack([half, conj(half.flip(-1))]).
    half = real + 1j * imag                                        # complex64 [B, L]
    warp_fft = jnp.concatenate([half, jnp.conj(half[:, ::-1])], axis=-1)  # [B, 2L]
    return warp_fft


# ------------------------------ param init -----------------------------------
def _linear(key, fan_in, fan_out):
    kw, kb = jax.random.split(key)
    bound = 1.0 / math.sqrt(fan_in)
    w = jax.random.uniform(kw, (fan_in, fan_out), jnp.float32, -bound, bound)
    b = jax.random.uniform(kb, (1, fan_out), jnp.float32, -bound, bound)
    return w, b


def init_params(key):
    keys = jax.random.split(key, 10)
    p = {}
    p['feature_grid'] = jax.random.uniform(keys[0], (GRID_C, GRID_H, GRID_W), jnp.float32)

    # grid_coordinates is constant -> positional encoding precomputed once here.
    grid_coordinates = jnp.arange(L, dtype=jnp.float32)[:, None]              # [L, 1]
    p['pos_emb'] = pos_encode(grid_coordinates, IDX_DIM)                      # [L, 64]

    # backbone: in = 2*GRID_C, channels = LAYER_CHANNELS
    in_c = 2 * GRID_C
    for i, c in enumerate(LAYER_CHANNELS):
        w, b = _linear(keys[1 + i], in_c, c)
        p[f'bb_w{i}'], p[f'bb_b{i}'] = w, b
        in_c = c

    # decoder: in = LAYER_CHANNELS[-1] + IDX_DIM, channels = DECODER_CHANNELS.
    # First-layer weight stored pre-split into the bb-part and pe-part blocks.
    in_c = DIN
    for i, c in enumerate(DECODER_CHANNELS):
        w, b = _linear(keys[4 + i], in_c, c)
        if i == 0:
            p['dec_w0_bb'] = w[:LAYER_CHANNELS[-1]]   # [32, 128]
            p['dec_w0_pe'] = w[LAYER_CHANNELS[-1]:]   # [64, 128]
            p['dec_b0'] = b
        else:
            p[f'dec_w{i}'], p[f'dec_b{i}'] = w, b
        in_c = c

    # heads (class_values=[] -> single regression output each), fused + transposed
    rw, rb = _linear(keys[7], DECODER_CHANNELS[-1], 1)
    iw, ib = _linear(keys[8], DECODER_CHANNELS[-1], 1)
    p['head_w_t'] = jnp.concatenate([rw.T, iw.T], axis=0)   # [2, 128]
    p['head_b_t'] = jnp.concatenate([rb.T, ib.T], axis=0)   # [2, 1]
    return p


# ---------------------------------- main --------------------------------------
if __name__ == "__main__":
    key = jax.random.PRNGKey(0)
    pkey, akey, bkey = jax.random.split(key, 3)
    params = init_params(pkey)

    # positions inside the [0, scene_x] x [0, scene_y] scene
    input_posA = jax.random.uniform(akey, (B, 2), jnp.float32) * jnp.array([SCENE_X, SCENE_Y])
    input_posB = jax.random.uniform(bkey, (B, 2), jnp.float32) * jnp.array([SCENE_X, SCENE_Y])

    fwd = jax.jit(naf_forward)
    out = fwd(params, input_posA, input_posB)
    out = jax.block_until_ready(out)

    assert out.shape == (B, WAVE_LENGTH), out.shape
    assert jnp.iscomplexobj(out)
    assert bool(jnp.all(jnp.isfinite(out.real)) & jnp.all(jnp.isfinite(out.imag)))
    print("KERNEL_OK")
</pallas_src>

<mosaic_0001>
module attributes {stable_mosaic.version = 11 : i64} {
  func.func @naf_kernel(%arg0: memref<2x64xf32, #tpu.memory_space<vmem>>, %arg1: memref<128x64xf32, #tpu.memory_space<vmem>>, %arg2: memref<64x64xf32, #tpu.memory_space<vmem>>, %arg3: memref<1x64xf32, #tpu.memory_space<vmem>>, %arg4: memref<64x64xf32, #tpu.memory_space<vmem>>, %arg5: memref<1x64xf32, #tpu.memory_space<vmem>>, %arg6: memref<64x32xf32, #tpu.memory_space<vmem>>, %arg7: memref<1x32xf32, #tpu.memory_space<vmem>>, %arg8: memref<32x128xf32, #tpu.memory_space<vmem>>, %arg9: memref<64x128xf32, #tpu.memory_space<vmem>>, %arg10: memref<1x128xf32, #tpu.memory_space<vmem>>, %arg11: memref<128x128xf32, #tpu.memory_space<vmem>>, %arg12: memref<1x128xf32, #tpu.memory_space<vmem>>, %arg13: memref<128x128xf32, #tpu.memory_space<vmem>>, %arg14: memref<1x128xf32, #tpu.memory_space<vmem>>, %arg15: memref<2x128xf32, #tpu.memory_space<vmem>>, %arg16: memref<2x1xf32, #tpu.memory_space<vmem>>, %arg17: memref<2x256xf32, #tpu.memory_space<vmem>>) attributes {dimension_semantics = [], scalar_prefetch = 0 : i64, scratch_operands = 0 : i64, tpu.core_type = #tpu.core_type<tc>} {
    %c0 = arith.constant 0 : index
    %c0_0 = arith.constant 0 : index
    %0 = vector.load %arg0[%c0, %c0_0] : memref<2x64xf32, #tpu.memory_space<vmem>>, vector<2x64xf32>
    %c0_1 = arith.constant 0 : index
    %c0_2 = arith.constant 0 : index
    %1 = vector.load %arg2[%c0_1, %c0_2] : memref<64x64xf32, #tpu.memory_space<vmem>>, vector<64x64xf32>
    %cst = arith.constant dense<0.000000e+00> : vector<2x64xf32>
    %2 = tpu.matmul %0, %1, %cst {dimension_numbers = #tpu.dot_dimension_numbers<[1], [0], [0], [1], [0, 0, 1, 1], [], []>} : vector<2x64xf32>, vector<64x64xf32>, vector<2x64xf32> -> vector<2x64xf32>
    %c0_3 = arith.constant 0 : index
    %c0_4 = arith.constant 0 : index
    %3 = vector.load %arg3[%c0_3, %c0_4] : memref<1x64xf32, #tpu.memory_space<vmem>>, vector<1x64xf32>
    %4 = vector.broadcast %3 : vector<1x64xf32> to vector<2x64xf32>
    %5 = arith.addf %2, %4 : vector<2x64xf32>
    %cst_5 = arith.constant 0.000000e+00 : f32
    %6 = vector.broadcast %cst_5 : f32 to vector<2x64xf32>
    %7 = arith.maximumf %5, %6 : vector<2x64xf32>
    %8 = arith.addf %7, %0 : vector<2x64xf32>
    %c0_6 = arith.constant 0 : index
    %c0_7 = arith.constant 0 : index
    %9 = vector.load %arg4[%c0_6, %c0_7] : memref<64x64xf32, #tpu.memory_space<vmem>>, vector<64x64xf32>
    %cst_8 = arith.constant dense<0.000000e+00> : vector<2x64xf32>
    %10 = tpu.matmul %8, %9, %cst_8 {dimension_numbers = #tpu.dot_dimension_numbers<[1], [0], [0], [1], [0, 0, 1, 1], [], []>} : vector<2x64xf32>, vector<64x64xf32>, vector<2x64xf32> -> vector<2x64xf32>
    %c0_9 = arith.constant 0 : index
    %c0_10 = arith.constant 0 : index
    %11 = vector.load %arg5[%c0_9, %c0_10] : memref<1x64xf32, #tpu.memory_space<vmem>>, vector<1x64xf32>
    %12 = vector.broadcast %11 : vector<1x64xf32> to vector<2x64xf32>
    %13 = arith.addf %10, %12 : vector<2x64xf32>
    %cst_11 = arith.constant 0.000000e+00 : f32
    %14 = vector.broadcast %cst_11 : f32 to vector<2x64xf32>
    %15 = arith.maximumf %13, %14 : vector<2x64xf32>
    %16 = arith.addf %15, %8 : vector<2x64xf32>
    %c0_12 = arith.constant 0 : index
    %c0_13 = arith.constant 0 : index
    %17 = vector.load %arg6[%c0_12, %c0_13] : memref<64x32xf32, #tpu.memory_space<vmem>>, vector<64x32xf32>
    %cst_14 = arith.constant dense<0.000000e+00> : vector<2x32xf32>
    %18 = tpu.matmul %16, %17, %cst_14 {dimension_numbers = #tpu.dot_dimension_numbers<[1], [0], [0], [1], [0, 0, 1, 1], [], []>} : vector<2x64xf32>, vector<64x32xf32>, vector<2x32xf32> -> vector<2x32xf32>
    %c0_15 = arith.constant 0 : index
    %c0_16 = arith.constant 0 : index
    %19 = vector.load %arg7[%c0_15, %c0_16] : memref<1x32xf32, #tpu.memory_space<vmem>>, vector<1x32xf32>
    %20 = vector.broadcast %19 : vector<1x32xf32> to vector<2x32xf32>
    %21 = arith.addf %18, %20 : vector<2x32xf32>
    %cst_17 = arith.constant 0.000000e+00 : f32
    %22 = vector.broadcast %cst_17 : f32 to vector<2x32xf32>
    %23 = arith.maximumf %21, %22 : vector<2x32xf32>
    %c0_18 = arith.constant 0 : index
    %c0_19 = arith.constant 0 : index
    %24 = vector.load %arg8[%c0_18, %c0_19] : memref<32x128xf32, #tpu.memory_space<vmem>>, vector<32x128xf32>
    %cst_20 = arith.constant dense<0.000000e+00> : vector<2x128xf32>
    %25 = tpu.matmul %23, %24, %cst_20 {dimension_numbers = #tpu.dot_dimension_numbers<[1], [0], [0], [1], [0, 0, 1, 1], [], []>} : vector<2x32xf32>, vector<32x128xf32>, vector<2x128xf32> -> vector<2x128xf32>
    %c0_21 = arith.constant 0 : index
    %c0_22 = arith.constant 0 : index
    %26 = vector.load %arg10[%c0_21, %c0_22] : memref<1x128xf32, #tpu.memory_space<vmem>>, vector<1x128xf32>
    %27 = vector.broadcast %26 : vector<1x128xf32> to vector<2x128xf32>
    %28 = arith.addf %25, %27 : vector<2x128xf32>
    %c0_23 = arith.constant 0 : index
    %c0_24 = arith.constant 0 : index
    %29 = vector.load %arg1[%c0_23, %c0_24] : memref<128x64xf32, #tpu.memory_space<vmem>>, vector<128x64xf32>
    %c0_25 = arith.constant 0 : index
    %c0_26 = arith.constant 0 : index
    %30 = vector.load %arg9[%c0_25, %c0_26] : memref<64x128xf32, #tpu.memory_space<vmem>>, vector<64x128xf32>
    %cst_27 = arith.constant dense<0.000000e+00> : vector<128x128xf32>
    %31 = tpu.matmul %29, %30, %cst_27 {dimension_numbers = #tpu.dot_dimension_numbers<[1], [0], [0], [1], [0, 0, 1, 1], [], []>} : vector<128x64xf32>, vector<64x128xf32>, vector<128x128xf32> -> vector<128x128xf32>
    %32 = vector.extract_strided_slice %28 {offsets = [0, 0], sizes = [1, 128], strides = [1, 1]} : vector<2x128xf32> to vector<1x128xf32>
    %33 = vector.broadcast %32 : vector<1x128xf32> to vector<128x128xf32>
    %34 = arith.addf %31, %33 : vector<128x128xf32>
    %cst_28 = arith.constant 0.000000e+00 : f32
    %35 = vector.broadcast %cst_28 : f32 to vector<128x128xf32>
    %36 = arith.maximumf %34, %35 : vector<128x128xf32>
    %37 = vector.extract_strided_slice %28 {offsets = [1, 0], sizes = [1, 128], strides = [1, 1]} : vector<2x128xf32> to vector<1x128xf32>
    %38 = vector.broadcast %37 : vector<1x128xf32> to vector<128x128xf32>
    %39 = arith.addf %31, %38 : vector<128x128xf32>
    %cst_29 = arith.constant 0.000000e+00 : f32
    %40 = vector.broadcast %cst_29 : f32 to vector<128x128xf32>
    %41 = arith.maximumf %39, %40 : vector<128x128xf32>
    %42 = tpu.concatenate %36, %41 in 0 : vector<128x128xf32>, vector<128x128xf32> -> vector<256x128xf32>
    %c0_30 = arith.constant 0 : index
    %c0_31 = arith.constant 0 : index
    %43 = vector.load %arg11[%c0_30, %c0_31] : memref<128x128xf32, #tpu.memory_space<vmem>>, vector<128x128xf32>
    %cst_32 = arith.constant dense<0.000000e+00> : vector<256x128xf32>
    %44 = tpu.matmul %42, %43, %cst_32 {dimension_numbers = #tpu.dot_dimension_numbers<[1], [0], [0], [1], [0, 0, 1, 1], [], []>} : vector<256x128xf32>, vector<128x128xf32>, vector<256x128xf32> -> vector<256x128xf32>
    %c0_33 = arith.constant 0 : index
    %c0_34 = arith.constant 0 : index
    %45 = vector.load %arg12[%c0_33, %c0_34] : memref<1x128xf32, #tpu.memory_space<vmem>>, vector<1x128xf32>
    %46 = vector.broadcast %45 : vector<1x128xf32> to vector<256x128xf32>
    %47 = arith.addf %44, %46 : vector<256x128xf32>
    %cst_35 = arith.constant 0.000000e+00 : f32
    %48 = vector.broadcast %cst_35 : f32 to vector<256x128xf32>
    %49 = arith.maximumf %47, %48 : vector<256x128xf32>
    %50 = arith.addf %49, %42 : vector<256x128xf32>
    %c0_36 = arith.constant 0 : index
    %c0_37 = arith.constant 0 : index
    %51 = vector.load %arg13[%c0_36, %c0_37] : memref<128x128xf32, #tpu.memory_space<vmem>>, vector<128x128xf32>
    %cst_38 = arith.constant dense<0.000000e+00> : vector<256x128xf32>
    %52 = tpu.matmul %50, %51, %cst_38 {dimension_numbers = #tpu.dot_dimension_numbers<[1], [0], [0], [1], [0, 0, 1, 1], [], []>} : vector<256x128xf32>, vector<128x128xf32>, vector<256x128xf32> -> vector<256x128xf32>
    %c0_39 = arith.constant 0 : index
    %c0_40 = arith.constant 0 : index
    %53 = vector.load %arg14[%c0_39, %c0_40] : memref<1x128xf32, #tpu.memory_space<vmem>>, vector<1x128xf32>
    %54 = vector.broadcast %53 : vector<1x128xf32> to vector<256x128xf32>
    %55 = arith.addf %52, %54 : vector<256x128xf32>
    %cst_41 = arith.constant 0.000000e+00 : f32
    %56 = vector.broadcast %cst_41 : f32 to vector<256x128xf32>
    %57 = arith.maximumf %55, %56 : vector<256x128xf32>
    %58 = arith.addf %57, %50 : vector<256x128xf32>
    %c0_42 = arith.constant 0 : index
    %c0_43 = arith.constant 0 : index
    %59 = vector.load %arg15[%c0_42, %c0_43] : memref<2x128xf32, #tpu.memory_space<vmem>>, vector<2x128xf32>
    "tpu.trace_start"() <{level = 10 : i32, message = "oh,nh->on"}> : () -> ()
    %cst_44 = arith.constant dense<0.000000e+00> : vector<2x256xf32>
    %60 = tpu.matmul %59, %58, %cst_44 {dimension_numbers = #tpu.dot_dimension_numbers<[1], [1], [0], [0], [0, 0, 1, 0], [], []>} : vector<2x128xf32>, vector<256x128xf32>, vector<2x256xf32> -> vector<2x256xf32>
    "tpu.trace_stop"() : () -> ()
    %c0_45 = arith.constant 0 : index
    %c0_46 = arith.constant 0 : index
    %61 = vector.load %arg16[%c0_45, %c0_46] : memref<2x1xf32, #tpu.memory_space<vmem>>, vector<2x1xf32>
    %62 = vector.broadcast %61 : vector<2x1xf32> to vector<2x256xf32>
    %63 = arith.addf %60, %62 : vector<2x256xf32>
    %c0_47 = arith.constant 0 : index
    %c0_48 = arith.constant 0 : index
    %64 = vector.load %arg17[%c0_47, %c0_48] : memref<2x256xf32, #tpu.memory_space<vmem>>, vector<2x256xf32>
    tpu.vector_store %arg17[%c0_47, %c0_48], %63 {strides = array<i32>} : memref<2x256xf32, #tpu.memory_space<vmem>>, vector<2x256xf32>,
    return
  }
}

</mosaic_0001>

<llo_original>
// kernel: neg.1
$region0: #{neg.1}
  #allocation0 [shape = 's32[1]{0}', space=sflag, size = 0x4, scoped, tag = 'scoped memory for neg.1']
  %s0 = inlined_call_operand.vmem [shape: f32[2,128], index: 0, kind: input, shape index: {}]
  %s1 = inlined_call_operand.vmem [shape: f32[2,128], index: 1, kind: output, shape index: {}]
  %v2 = vld [vmem:[%s0] sm:$0x3]
  %3 = xla_tuple %v2
  %4 = xla_tuple %3
  %v5 = vxor.u32 %v2, 2147483648
  %6 = xla_tuple %v5
  %7 = vst [vmem:[%s1] sm:$0x3] %v5

// kernel: custom-call
$region0: #{custom-call}
  %s0 = inlined_call_operand.vmem [shape: f32[2,256], index: 0, kind: input, shape index: {}]
  %s1 = inlined_call_operand.vmem [shape: f32[2,256], index: 1, kind: input, shape index: {}]
  %s2 = inlined_call_operand.hbm [shape: c64[2,256], index: 2, kind: output, shape index: {}]
  %s3 = scalar_lea.hbm %s2, 64
  $region1: #{custom-call} parent=0
    #allocation0 [shape = 's32[1]{0}', space=sflag, size = 0x4, scoped, tag = 'scoped memory for custom-call']
    %4 = vsyncpa [#allocation0], 0
    %s5 = sshll.u32 %s0, 4
    %s6 = int_to_ptr.vmem [resolvable:$true] %s5
    %8 = dma.vmem_to_hbm [thread:$0]  %s6, 64, %s2, [#allocation0]
    %9 = dma.done [#allocation0], 64
    %10 = vsyncpa [#allocation0], 1
  $region2: #{custom-call} parent=0
    #allocation1 [shape = 's32[1]{0}', space=sflag, size = 0x4, scoped, tag = 'scoped memory for custom-call']
    %11 = vsyncpa [#allocation1], 0
    %s12 = sshll.u32 %s1, 4
    %s13 = int_to_ptr.vmem [resolvable:$true] %s12
    %15 = dma.vmem_to_hbm [thread:$0]  %s13, 64, %s3, [#allocation1]
    %16 = dma.done [#allocation1], 64
    %17 = vsyncpa [#allocation1], 1

// kernel: naf_forward.1
$region0: #{naf_forward.1}
  #allocation0 [shape = 'u32[]', space=smem, size = 0x4, offset = 0x4, fixed_abs, tag = 'smem constant byte address 0x4 - core index']
  #allocation1 [shape = 'u32[144,128]{1,0:T(1,128)}', space=vmem, size = 0x12000, scoped, tag = 'internal scratch']
  %s0 = inlined_call_operand.vmem [shape: f32[2,64], index: 0, kind: input, shape index: {}]
  %s1 = inlined_call_operand.vmem [shape: f32[128,64], index: 1, kind: input, shape index: {}]
  %s2 = inlined_call_operand.vmem [shape: f32[64,64], index: 2, kind: input, shape index: {}]
  %s3 = inlined_call_operand.vmem [shape: f32[1,64], index: 3, kind: input, shape index: {}]
  %s4 = inlined_call_operand.vmem [shape: f32[64,64], index: 4, kind: input, shape index: {}]
  %s5 = inlined_call_operand.vmem [shape: f32[1,64], index: 5, kind: input, shape index: {}]
  %s6 = inlined_call_operand.vmem [shape: f32[64,32], index: 6, kind: input, shape index: {}]
  %s7 = inlined_call_operand.vmem [shape: f32[1,32], index: 7, kind: input, shape index: {}]
  %s8 = inlined_call_operand.vmem [shape: f32[32,128], index: 8, kind: input, shape index: {}]
  %s9 = inlined_call_operand.vmem [shape: f32[64,128], index: 9, kind: input, shape index: {}]
  %s10 = inlined_call_operand.vmem [shape: f32[1,128], index: 10, kind: input, shape index: {}]
  %s11 = inlined_call_operand.vmem [shape: f32[128,128], index: 11, kind: input, shape index: {}]
  %s12 = inlined_call_operand.vmem [shape: f32[1,128], index: 12, kind: input, shape index: {}]
  %s13 = inlined_call_operand.vmem [shape: f32[128,128], index: 13, kind: input, shape index: {}]
  %s14 = inlined_call_operand.vmem [shape: f32[1,128], index: 14, kind: input, shape index: {}]
  %s15 = inlined_call_operand.vmem [shape: f32[2,128], index: 15, kind: input, shape index: {}]
  %s16 = inlined_call_operand.vmem [shape: f32[2,1], index: 16, kind: input, shape index: {}]
  %s17 = inlined_call_operand.vmem [shape: f32[2,256], index: 17, kind: output, shape index: {}]
  %s18 = sld [smem:[#allocation0]]
  $region78: #{naf_forward.1} parent=0
    _
  %s20 = ssub.s32 1, %s18
  %s21 = scalar_select 0, %s20, %s18
  // Predicated region
  $region2: #{naf_forward.1} parent=0 // pred_check
    _
  $region3: #{naf_forward.1} parent=0 // pred_check_branch
    %23 = sbr.rel (0) target = $region5
  $region4: #{naf_forward.1} parent=0 // pred_region
    _
  $region5: #{naf_forward.1} parent=0 // pred_fallthru
    _
  // Predicated region
  $region6: #{naf_forward.1} parent=0 // pred_check
    _
  $region7: #{naf_forward.1} parent=0 // pred_check_branch
    %25 = sbr.rel (0) target = $region9
  $region8: #{naf_forward.1} parent=0 // pred_region
    _
  $region9: #{naf_forward.1} parent=0 // pred_fallthru
    _
  // Predicated region
  $region10: #{naf_forward.1} parent=0 // pred_check
    _
  $region11: #{naf_forward.1} parent=0 // pred_check_branch
    %27 = sbr.rel (0) target = $region13
  $region12: #{naf_forward.1} parent=0 // pred_region
    _
  $region13: #{naf_forward.1} parent=0 // pred_fallthru
    _
  // Predicated region
  $region14: #{naf_forward.1} parent=0 // pred_check
    _
  $region15: #{naf_forward.1} parent=0 // pred_check_branch
    %29 = sbr.rel (0) target = $region17
  $region16: #{naf_forward.1} parent=0 // pred_region
    _
  $region17: #{naf_forward.1} parent=0 // pred_fallthru
    _
  // Predicated region
  $region18: #{naf_forward.1} parent=0 // pred_check
    _
  $region19: #{naf_forward.1} parent=0 // pred_check_branch
    %31 = sbr.rel (0) target = $region21
  $region20: #{naf_forward.1} parent=0 // pred_region
    _
  $region21: #{naf_forward.1} parent=0 // pred_fallthru
    _
  // Predicated region
  $region22: #{naf_forward.1} parent=0 // pred_check
    _
  $region23: #{naf_forward.1} parent=0 // pred_check_branch
    %33 = sbr.rel (0) target = $region25
  $region24: #{naf_forward.1} parent=0 // pred_region
    _
  $region25: #{naf_forward.1} parent=0 // pred_fallthru
    _
  // Predicated region
  $region26: #{naf_forward.1} parent=0 // pred_check
    _
  $region27: #{naf_forward.1} parent=0 // pred_check_branch
    %35 = sbr.rel (0) target = $region29
  $region28: #{naf_forward.1} parent=0 // pred_region
    _
  $region29: #{naf_forward.1} parent=0 // pred_fallthru
    _
  // Predicated region
  $region30: #{naf_forward.1} parent=0 // pred_check
    _
  $region31: #{naf_forward.1} parent=0 // pred_check_branch
    %37 = sbr.rel (0) target = $region33
  $region32: #{naf_forward.1} parent=0 // pred_region
    _
  $region33: #{naf_forward.1} parent=0 // pred_fallthru
    _
  // Predicated region
  $region34: #{naf_forward.1} parent=0 // pred_check
    _
  $region35: #{naf_forward.1} parent=0 // pred_check_branch
    %39 = sbr.rel (0) target = $region37
  $region36: #{naf_forward.1} parent=0 // pred_region
    _
  $region37: #{naf_forward.1} parent=0 // pred_fallthru
    _
  // Predicated region
  $region38: #{naf_forward.1} parent=0 // pred_check
    _
  $region39: #{naf_forward.1} parent=0 // pred_check_branch
    %41 = sbr.rel (0) target = $region41
  $region40: #{naf_forward.1} parent=0 // pred_region
    _
  $region41: #{naf_forward.1} parent=0 // pred_fallthru
    _
  // Predicated region
  $region42: #{naf_forward.1} parent=0 // pred_check
    _
  $region43: #{naf_forward.1} parent=0 // pred_check_branch
    %43 = sbr.rel (0) target = $region45
  $region44: #{naf_forward.1} parent=0 // pred_region
    _
  $region45: #{naf_forward.1} parent=0 // pred_fallthru
    _
  // Predicated region
  $region46: #{naf_forward.1} parent=0 // pred_check
    _
  $region47: #{naf_forward.1} parent=0 // pred_check_branch
    %45 = sbr.rel (0) target = $region49
  $region48: #{naf_forward.1} parent=0 // pred_region
    _
  $region49: #{naf_forward.1} parent=0 // pred_fallthru
    _
  // Predicated region
  $region50: #{naf_forward.1} parent=0 // pred_check
    _
  $region51: #{naf_forward.1} parent=0 // pred_check_branch
    %47 = sbr.rel (0) target = $region53
  $region52: #{naf_forward.1} parent=0 // pred_region
    _
  $region53: #{naf_forward.1} parent=0 // pred_fallthru
    _
  // Predicated region
  $region54: #{naf_forward.1} parent=0 // pred_check
    _
  $region55: #{naf_forward.1} parent=0 // pred_check_branch
    %49 = sbr.rel (0) target = $region57
  $region56: #{naf_forward.1} parent=0 // pred_region
    _
  $region57: #{naf_forward.1} parent=0 // pred_fallthru
    _
  // Predicated region
  $region58: #{naf_forward.1} parent=0 // pred_check
    _
  $region59: #{naf_forward.1} parent=0 // pred_check_branch
    %51 = sbr.rel (0) target = $region61
  $region60: #{naf_forward.1} parent=0 // pred_region
    _
  $region61: #{naf_forward.1} parent=0 // pred_fallthru
    _
  // Predicated region
  $region62: #{naf_forward.1} parent=0 // pred_check
    _
  $region63: #{naf_forward.1} parent=0 // pred_check_branch
    %53 = sbr.rel (0) target = $region65
  $region64: #{naf_forward.1} parent=0 // pred_region
    _
  $region65: #{naf_forward.1} parent=0 // pred_fallthru
    _
  // Predicated region
  $region66: #{naf_forward.1} parent=0 // pred_check
    _
  $region67: #{naf_forward.1} parent=0 // pred_check_branch
    %55 = sbr.rel (0) target = $region69
  $region68: #{naf_forward.1} parent=0 // pred_region
    _
  $region69: #{naf_forward.1} parent=0 // pred_fallthru
    _
  %v56 = vld [vmem:[%s0] sm:$0x3]
  %v57 = vld [vmem:[%s2] sm:$0xff]
  %v58 = vld [vmem:[%s2 + $0x8] sm:$0xff]
  %v59 = vld [vmem:[%s2 + $0x10] sm:$0xff]
  %v60 = vld [vmem:[%s2 + $0x18] sm:$0xff]
  %v61 = vld [vmem:[%s2 + $0x20] sm:$0xff]
  %v62 = vld [vmem:[%s2 + $0x28] sm:$0xff]
  %v63 = vld [vmem:[%s2 + $0x30] sm:$0xff]
  %v64 = vld [vmem:[%s2 + $0x38] sm:$0xff]
  %v65 = vld [vmem:[%s3] sm:$0x1]
  %v67 = vlaneseq
  %v68 = vshrl.u32 %v67, 7
  %v69 = vsub.s32 0, %v68
  %v70 = vrot.slane %v65, %v69
  %vm72 = vcmask 523264
  %v74 = vsel %vm72, %v56, 0
  %76 = vmatprep.subr.mxu0 0.0
  %77 = vmatpush1.msra.mxu0 0.0
  %78 = vmatprep.subr.mxu0 0.0
  %79 = vmatpush1.msra.mxu0 0.0
  %80 = vmatprep.subr.mxu0 0.0
  %81 = vmatpush1.msra.mxu0 0.0
  %82 = vmatprep.subr.mxu0 0.0
  %83 = vmatpush1.msra.mxu0 0.0
  %84 = vmatprep.subr.mxu0 0.0
  %85 = vmatpush1.msra.mxu0 0.0
  %86 = vmatprep.subr.mxu0 0.0
  %87 = vmatpush1.msra.mxu0 0.0
  %88 = vmatprep.subr.mxu0 0.0
  %89 = vmatpush1.msra.mxu0 0.0
  %90 = vmatprep.subr.mxu0 0.0
  %91 = vmatpush1.msra.mxu0 0.0
  %92 = vmatprep.subr.mxu0 0.0
  %93 = vmatpush1.msra.mxu0 %v64
  %94 = vmatprep.subr.mxu0 0.0
  %95 = vmatpush1.msra.mxu0 %v63
  %96 = vmatprep.subr.mxu0 0.0
  %97 = vmatpush1.msra.mxu0 %v62
  %98 = vmatprep.subr.mxu0 0.0
  %99 = vmatpush1.msra.mxu0 %v61
  %100 = vmatprep.subr.mxu0 0.0
  %101 = vmatpush1.msra.mxu0 %v60
  %102 = vmatprep.subr.mxu0 0.0
  %103 = vmatpush1.msra.mxu0 %v59
  %104 = vmatprep.subr.mxu0 0.0
  %105 = vmatpush1.msra.mxu0 %v58
  %106 = vmatprep.subr.mxu0 0.0
  %107 = vmatpush1.msra.mxu0 %v57
  %108 = vmatprep.subr.mxu0 0.0
  %109 = vmatpush2.msra.mxu0 0.0
  %110 = vmatprep.subr.mxu0 0.0
  %111 = vmatpush2.msra.mxu0 0.0
  %112 = vmatprep.subr.mxu0 0.0
  %113 = vmatpush2.msra.mxu0 0.0
  %114 = vmatprep.subr.mxu0 0.0
  %115 = vmatpush2.msra.mxu0 0.0
  %116 = vmatprep.subr.mxu0 0.0
  %117 = vmatpush2.msra.mxu0 0.0
  %118 = vmatprep.subr.mxu0 0.0
  %119 = vmatpush2.msra.mxu0 0.0
  %120 = vmatprep.subr.mxu0 0.0
  %121 = vmatpush2.msra.mxu0 0.0
  %122 = vmatprep.subr.mxu0 0.0
  %123 = vmatpush2.msra.mxu0 0.0
  %124 = vmatprep.subr.mxu0 0.0
  %125 = vmatpush2.msra.mxu0 0.0
  %126 = vmatprep.subr.mxu0 0.0
  %127 = vmatpush2.msra.mxu0 0.0
  %128 = vmatprep.subr.mxu0 0.0
  %129 = vmatpush2.msra.mxu0 0.0
  %130 = vmatprep.subr.mxu0 0.0
  %131 = vmatpush2.msra.mxu0 0.0
  %132 = vmatprep.subr.mxu0 0.0
  %133 = vmatpush2.msra.mxu0 0.0
  %134 = vmatprep.subr.mxu0 0.0
  %135 = vmatpush2.msra.mxu0 0.0
  %136 = vmatprep.subr.mxu0 0.0
  %137 = vmatpush2.msra.mxu0 0.0
  %138 = vmatprep.subr.mxu0 0.0
  %139 = vmatpush2.msra.mxu0 0.0
  %140 = vmatprep.mubr.f32.mxu0 0.0
  %141 = vmatmul.mubr.f32.gmra.mxu0 %v74
  %v142 = vpop.f32.mrf.mxu0
  %v143 = vadd.f32 %v70, %v142
  %v144 = vpop.f32.mrf.mxu0
  %145 = vdwg.mxu0
  %v146 = vmax.f32 %v143, 0.0
  %v147 = vadd.f32 %v146, %v56
  %v148 = vld [vmem:[%s4] sm:$0xff]
  %v149 = vld [vmem:[%s4 + $0x8] sm:$0xff]
  %v150 = vld [vmem:[%s4 + $0x10] sm:$0xff]
  %v151 = vld [vmem:[%s4 + $0x18] sm:$0xff]
  %v152 = vld [vmem:[%s4 + $0x20] sm:$0xff]
  %v153 = vld [vmem:[%s4 + $0x28] sm:$0xff]
  %v154 = vld [vmem:[%s4 + $0x30] sm:$0xff]
  %v155 = vld [vmem:[%s4 + $0x38] sm:$0xff]
  %v156 = vld [vmem:[%s5] sm:$0x1]
  %v158 = vlaneseq
  %v159 = vshrl.u32 %v158, 7
  %v160 = vsub.s32 0, %v159
  %v161 = vrot.slane %v156, %v160
  %v164 = vsel %vm72, %v147, 0
  %166 = vmatprep.subr.mxu0 0.0
  %167 = vmatpush1.msra.mxu0 0.0
  %168 = vmatprep.subr.mxu0 0.0
  %169 = vmatpush1.msra.mxu0 0.0
  %170 = vmatprep.subr.mxu0 0.0
  %171 = vmatpush1.msra.mxu0 0.0
  %172 = vmatprep.subr.mxu0 0.0
  %173 = vmatpush1.msra.mxu0 0.0
  %174 = vmatprep.subr.mxu0 0.0
  %175 = vmatpush1.msra.mxu0 0.0
  %176 = vmatprep.subr.mxu0 0.0
  %177 = vmatpush1.msra.mxu0 0.0
  %178 = vmatprep.subr.mxu0 0.0
  %179 = vmatpush1.msra.mxu0 0.0
  %180 = vmatprep.subr.mxu0 0.0
  %181 = vmatpush1.msra.mxu0 0.0
  %182 = vmatprep.subr.mxu0 0.0
  %183 = vmatpush1.msra.mxu0 %v155
  %184 = vmatprep.subr.mxu0 0.0
  %185 = vmatpush1.msra.mxu0 %v154
  %186 = vmatprep.subr.mxu0 0.0
  %187 = vmatpush1.msra.mxu0 %v153
  %188 = vmatprep.subr.mxu0 0.0
  %189 = vmatpush1.msra.mxu0 %v152
  %190 = vmatprep.subr.mxu0 0.0
  %191 = vmatpush1.msra.mxu0 %v151
  %192 = vmatprep.subr.mxu0 0.0
  %193 = vmatpush1.msra.mxu0 %v150
  %194 = vmatprep.subr.mxu0 0.0
  %195 = vmatpush1.msra.mxu0 %v149
  %196 = vmatprep.subr.mxu0 0.0
  %197 = vmatpush1.msra.mxu0 %v148
  %198 = vmatprep.subr.mxu0 0.0
  %199 = vmatpush2.msra.mxu0 0.0
  %200 = vmatprep.subr.mxu0 0.0
  %201 = vmatpush2.msra.mxu0 0.0
  %202 = vmatprep.subr.mxu0 0.0
  %203 = vmatpush2.msra.mxu0 0.0
  %204 = vmatprep.subr.mxu0 0.0
  %205 = vmatpush2.msra.mxu0 0.0
  %206 = vmatprep.subr.mxu0 0.0
  %207 = vmatpush2.msra.mxu0 0.0
  %208 = vmatprep.subr.mxu0 0.0
  %209 = vmatpush2.msra.mxu0 0.0
  %210 = vmatprep.subr.mxu0 0.0
  %211 = vmatpush2.msra.mxu0 0.0
  %212 = vmatprep.subr.mxu0 0.0
  %213 = vmatpush2.msra.mxu0 0.0
  %214 = vmatprep.subr.mxu0 0.0
  %215 = vmatpush2.msra.mxu0 0.0
  %216 = vmatprep.subr.mxu0 0.0
  %217 = vmatpush2.msra.mxu0 0.0
  %218 = vmatprep.subr.mxu0 0.0
  %219 = vmatpush2.msra.mxu0 0.0
  %220 = vmatprep.subr.mxu0 0.0
  %221 = vmatpush2.msra.mxu0 0.0
  %222 = vmatprep.subr.mxu0 0.0
  %223 = vmatpush2.msra.mxu0 0.0
  %224 = vmatprep.subr.mxu0 0.0
  %225 = vmatpush2.msra.mxu0 0.0
  %226 = vmatprep.subr.mxu0 0.0
  %227 = vmatpush2.msra.mxu0 0.0
  %228 = vmatprep.subr.mxu0 0.0
  %229 = vmatpush2.msra.mxu0 0.0
  %230 = vmatprep.mubr.f32.mxu0 0.0
  %231 = vmatmul.mubr.f32.gmra.mxu0 %v164
  %v232 = vpop.f32.mrf.mxu0
  %v233 = vadd.f32 %v161, %v232
  %v234 = vpop.f32.mrf.mxu0
  %235 = vdwg.mxu0
  %v236 = vmax.f32 %v233, 0.0
  %v237 = vadd.f32 %v236, %v147
  %v238 = vld [vmem:[%s6] sm:$0xff]
  %v239 = vld [vmem:[%s6 + $0x8] sm:$0xff]
  %v240 = vld [vmem:[%s6 + $0x10] sm:$0xff]
  %v241 = vld [vmem:[%s6 + $0x18] sm:$0xff]
  %v242 = vld [vmem:[%s6 + $0x20] sm:$0xff]
  %v243 = vld [vmem:[%s6 + $0x28] sm:$0xff]
  %v244 = vld [vmem:[%s6 + $0x30] sm:$0xff]
  %v245 = vld [vmem:[%s6 + $0x38] sm:$0xff]
  %v246 = vld [vmem:[%s7] sm:$0x1]
  %v248 = vlaneseq
  %v249 = vshrl.u32 %v248, 7
  %v250 = vsub.s32 0, %v249
  %v251 = vrot.slane %v246, %v250
  %v254 = vsel %vm72, %v237, 0
  %256 = vmatprep.subr.mxu0 0.0
  %257 = vmatpush1.msra.mxu0 0.0
  %258 = vmatprep.subr.mxu0 0.0
  %259 = vmatpush1.msra.mxu0 0.0
  %260 = vmatprep.subr.mxu0 0.0
  %261 = vmatpush1.msra.mxu0 0.0
  %262 = vmatprep.subr.mxu0 0.0
  %263 = vmatpush1.msra.mxu0 0.0
  %264 = vmatprep.subr.mxu0 0.0
  %265 = vmatpush1.msra.mxu0 0.0
  %266 = vmatprep.subr.mxu0 0.0
  %267 = vmatpush1.msra.mxu0 0.0
  %268 = vmatprep.subr.mxu0 0.0
  %269 = vmatpush1.msra.mxu0 0.0
  %270 = vmatprep.subr.mxu0 0.0
  %271 = vmatpush1.msra.mxu0 0.0
  %272 = vmatprep.subr.mxu0 0.0
  %273 = vmatpush1.msra.mxu0 %v245
  %274 = vmatprep.subr.mxu0 0.0
  %275 = vmatpush1.msra.mxu0 %v244
  %276 = vmatprep.subr.mxu0 0.0
  %277 = vmatpush1.msra.mxu0 %v243
  %278 = vmatprep.subr.mxu0 0.0
  %279 = vmatpush1.msra.mxu0 %v242
  %280 = vmatprep.subr.mxu0 0.0
  %281 = vmatpush1.msra.mxu0 %v241
  %282 = vmatprep.subr.mxu0 0.0
  %283 = vmatpush1.msra.mxu0 %v240
  %284 = vmatprep.subr.mxu0 0.0
  %285 = vmatpush1.msra.mxu0 %v239
  %286 = vmatprep.subr.mxu0 0.0
  %287 = vmatpush1.msra.mxu0 %v238
  %288 = vmatprep.subr.mxu0 0.0
  %289 = vmatpush2.msra.mxu0 0.0
  %290 = vmatprep.subr.mxu0 0.0
  %291 = vmatpush2.msra.mxu0 0.0
  %292 = vmatprep.subr.mxu0 0.0
  %293 = vmatpush2.msra.mxu0 0.0
  %294 = vmatprep.subr.mxu0 0.0
  %295 = vmatpush2.msra.mxu0 0.0
  %296 = vmatprep.subr.mxu0 0.0
  %297 = vmatpush2.msra.mxu0 0.0
  %298 = vmatprep.subr.mxu0 0.0
  %299 = vmatpush2.msra.mxu0 0.0
  %300 = vmatprep.subr.mxu0 0.0
  %301 = vmatpush2.msra.mxu0 0.0
  %302 = vmatprep.subr.mxu0 0.0
  %303 = vmatpush2.msra.mxu0 0.0
  %304 = vmatprep.subr.mxu0 0.0
  %305 = vmatpush2.msra.mxu0 0.0
  %306 = vmatprep.subr.mxu0 0.0
  %307 = vmatpush2.msra.mxu0 0.0
  %308 = vmatprep.subr.mxu0 0.0
  %309 = vmatpush2.msra.mxu0 0.0
  %310 = vmatprep.subr.mxu0 0.0
  %311 = vmatpush2.msra.mxu0 0.0
  %312 = vmatprep.subr.mxu0 0.0
  %313 = vmatpush2.msra.mxu0 0.0
  %314 = vmatprep.subr.mxu0 0.0
  %315 = vmatpush2.msra.mxu0 0.0
  %316 = vmatprep.subr.mxu0 0.0
  %317 = vmatpush2.msra.mxu0 0.0
  %318 = vmatprep.subr.mxu0 0.0
  %319 = vmatpush2.msra.mxu0 0.0
  %320 = vmatprep.mubr.f32.mxu0 0.0
  %321 = vmatmul.mubr.f32.gmra.mxu0 %v254
  %v322 = vpop.f32.mrf.mxu0
  %v323 = vadd.f32 %v251, %v322
  %v324 = vpop.f32.mrf.mxu0
  %325 = vdwg.mxu0
  %v326 = vmax.f32 %v323, 0.0
  %v327 = vld [vmem:[%s8] sm:$0xff]
  %v328 = vld [vmem:[%s8 + $0x8] sm:$0xff]
  %v329 = vld [vmem:[%s8 + $0x10] sm:$0xff]
  %v330 = vld [vmem:[%s8 + $0x18] sm:$0xff]
  %v331 = vld [vmem:[%s10] sm:$0x1]
  %v333 = vlaneseq
  %v334 = vshrl.u32 %v333, 7
  %v335 = vsub.s32 0, %v334
  %v336 = vrot.slane %v331, %v335
  %vm338 = vcmask 261120
  %v340 = vsel %vm338, %v326, 0
  %342 = vmatprep.subr.mxu0 0.0
  %343 = vmatpush1.msra.mxu0 0.0
  %344 = vmatprep.subr.mxu0 0.0
  %345 = vmatpush1.msra.mxu0 0.0
  %346 = vmatprep.subr.mxu0 0.0
  %347 = vmatpush1.msra.mxu0 0.0
  %348 = vmatprep.subr.mxu0 0.0
  %349 = vmatpush1.msra.mxu0 0.0
  %350 = vmatprep.subr.mxu0 0.0
  %351 = vmatpush1.msra.mxu0 0.0
  %352 = vmatprep.subr.mxu0 0.0
  %353 = vmatpush1.msra.mxu0 0.0
  %354 = vmatprep.subr.mxu0 0.0
  %355 = vmatpush1.msra.mxu0 0.0
  %356 = vmatprep.subr.mxu0 0.0
  %357 = vmatpush1.msra.mxu0 0.0
  %358 = vmatprep.subr.mxu0 0.0
  %359 = vmatpush1.msra.mxu0 0.0
  %360 = vmatprep.subr.mxu0 0.0
  %361 = vmatpush1.msra.mxu0 0.0
  %362 = vmatprep.subr.mxu0 0.0
  %363 = vmatpush1.msra.mxu0 0.0
  %364 = vmatprep.subr.mxu0 0.0
  %365 = vmatpush1.msra.mxu0 0.0
  %366 = vmatprep.subr.mxu0 0.0
  %367 = vmatpush1.msra.mxu0 %v330
  %368 = vmatprep.subr.mxu0 0.0
  %369 = vmatpush1.msra.mxu0 %v329
  %370 = vmatprep.subr.mxu0 0.0
  %371 = vmatpush1.msra.mxu0 %v328
  %372 = vmatprep.subr.mxu0 0.0
  %373 = vmatpush1.msra.mxu0 %v327
  %374 = vmatprep.subr.mxu0 0.0
  %375 = vmatpush2.msra.mxu0 0.0
  %376 = vmatprep.subr.mxu0 0.0
  %377 = vmatpush2.msra.mxu0 0.0
  %378 = vmatprep.subr.mxu0 0.0
  %379 = vmatpush2.msra.mxu0 0.0
  %380 = vmatprep.subr.mxu0 0.0
  %381 = vmatpush2.msra.mxu0 0.0
  %382 = vmatprep.subr.mxu0 0.0
  %383 = vmatpush2.msra.mxu0 0.0
  %384 = vmatprep.subr.mxu0 0.0
  %385 = vmatpush2.msra.mxu0 0.0
  %386 = vmatprep.subr.mxu0 0.0
  %387 = vmatpush2.msra.mxu0 0.0
  %388 = vmatprep.subr.mxu0 0.0
  %389 = vmatpush2.msra.mxu0 0.0
  %390 = vmatprep.subr.mxu0 0.0
  %391 = vmatpush2.msra.mxu0 0.0
  %392 = vmatprep.subr.mxu0 0.0
  %393 = vmatpush2.msra.mxu0 0.0
  %394 = vmatprep.subr.mxu0 0.0
  %395 = vmatpush2.msra.mxu0 0.0
  %396 = vmatprep.subr.mxu0 0.0
  %397 = vmatpush2.msra.mxu0 0.0
  %398 = vmatprep.subr.mxu0 0.0
  %399 = vmatpush2.msra.mxu0 0.0
  %400 = vmatprep.subr.mxu0 0.0
  %401 = vmatpush2.msra.mxu0 0.0
  %402 = vmatprep.subr.mxu0 0.0
  %403 = vmatpush2.msra.mxu0 0.0
  %404 = vmatprep.subr.mxu0 0.0
  %405 = vmatpush2.msra.mxu0 0.0
  %406 = vmatprep.mubr.f32.mxu0 0.0
  %407 = vmatmul.mubr.f32.gmra.mxu0 %v340
  %v408 = vpop.f32.mrf.mxu0
  %v409 = vadd.f32 %v336, %v408
  %v410 = vpop.f32.mrf.mxu0
  %411 = vdwg.mxu0
  %v412 = vld [vmem:[%s1] sm:$0xff]
  %v413 = vld [vmem:[%s1 + $0x8] sm:$0xff]
  %v414 = vld [vmem:[%s1 + $0x10] sm:$0xff]
  %v415 = vld [vmem:[%s1 + $0x18] sm:$0xff]
  %v416 = vld [vmem:[%s1 + $0x20] sm:$0xff]
  %v417 = vld [vmem:[%s1 + $0x28] sm:$0xff]
  %v418 = vld [vmem:[%s1 + $0x30] sm:$0xff]
  %v419 = vld [vmem:[%s1 + $0x38] sm:$0xff]
  %v420 = vld [vmem:[%s1 + $0x40] sm:$0xff]
  %v421 = vld [vmem:[%s1 + $0x48] sm:$0xff]
  %v422 = vld [vmem:[%s1 + $0x50] sm:$0xff]
  %v423 = vld [vmem:[%s1 + $0x58] sm:$0xff]
  %v424 = vld [vmem:[%s1 + $0x60] sm:$0xff]
  %v425 = vld [vmem:[%s1 + $0x68] sm:$0xff]
  %v426 = vld [vmem:[%s1 + $0x70] sm:$0xff]
  %v427 = vld [vmem:[%s1 + $0x78] sm:$0xff]
  %v428 = vld [vmem:[%s9] sm:$0xff]
  %v429 = vld [vmem:[%s9 + $0x8] sm:$0xff]
  %v430 = vld [vmem:[%s9 + $0x10] sm:$0xff]
  %v431 = vld [vmem:[%s9 + $0x18] sm:$0xff]
  %v432 = vld [vmem:[%s9 + $0x20] sm:$0xff]
  %v433 = vld [vmem:[%s9 + $0x28] sm:$0xff]
  %v434 = vld [vmem:[%s9 + $0x30] sm:$0xff]
  %v435 = vld [vmem:[%s9 + $0x38] sm:$0xff]
  %v437 = vsel %vm72, %v412, 0
  %v440 = vsel %vm72, %v413, 0
  %v443 = vsel %vm72, %v414, 0
  %v446 = vsel %vm72, %v415, 0
  %v449 = vsel %vm72, %v416, 0
  %v452 = vsel %vm72, %v417, 0
  %v455 = vsel %vm72, %v418, 0
  %v458 = vsel %vm72, %v419, 0
  %v461 = vsel %vm72, %v420, 0
  %v464 = vsel %vm72, %v421, 0
  %v467 = vsel %vm72, %v422, 0
  %v470 = vsel %vm72, %v423, 0
  %v473 = vsel %vm72, %v424, 0
  %v476 = vsel %vm72, %v425, 0
  %v479 = vsel %vm72, %v426, 0
  %v482 = vsel %vm72, %v427, 0
  %484 = vmatprep.subr.mxu0 0.0
  %485 = vmatpush1.msra.mxu0 0.0
  %486 = vmatprep.subr.mxu0 0.0
  %487 = vmatpush1.msra.mxu0 0.0
  %488 = vmatprep.subr.mxu0 0.0
  %489 = vmatpush1.msra.mxu0 0.0
  %490 = vmatprep.subr.mxu0 0.0
  %491 = vmatpush1.msra.mxu0 0.0
  %492 = vmatprep.subr.mxu0 0.0
  %493 = vmatpush1.msra.mxu0 0.0
  %494 = vmatprep.subr.mxu0 0.0
  %495 = vmatpush1.msra.mxu0 0.0
  %496 = vmatprep.subr.mxu0 0.0
  %497 = vmatpush1.msra.mxu0 0.0
  %498 = vmatprep.subr.mxu0 0.0
  %499 = vmatpush1.msra.mxu0 0.0
  %500 = vmatprep.subr.mxu0 0.0
  %501 = vmatpush1.msra.mxu0 %v435
  %502 = vmatprep.subr.mxu0 0.0
  %503 = vmatpush1.msra.mxu0 %v434
  %504 = vmatprep.subr.mxu0 0.0
  %505 = vmatpush1.msra.mxu0 %v433
  %506 = vmatprep.subr.mxu0 0.0
  %507 = vmatpush1.msra.mxu0 %v432
  %508 = vmatprep.subr.mxu0 0.0
  %509 = vmatpush1.msra.mxu0 %v431
  %510 = vmatprep.subr.mxu0 0.0
  %511 = vmatpush1.msra.mxu0 %v430
  %512 = vmatprep.subr.mxu0 0.0
  %513 = vmatpush1.msra.mxu0 %v429
  %514 = vmatprep.subr.mxu0 0.0
  %515 = vmatpush1.msra.mxu0 %v428
  %516 = vmatprep.subr.mxu0 0.0
  %517 = vmatpush2.msra.mxu0 0.0
  %518 = vmatprep.subr.mxu0 0.0
  %519 = vmatpush2.msra.mxu0 0.0
  %520 = vmatprep.subr.mxu0 0.0
  %521 = vmatpush2.msra.mxu0 0.0
  %522 = vmatprep.subr.mxu0 0.0
  %523 = vmatpush2.msra.mxu0 0.0
  %524 = vmatprep.subr.mxu0 0.0
  %525 = vmatpush2.msra.mxu0 0.0
  %526 = vmatprep.subr.mxu0 0.0
  %527 = vmatpush2.msra.mxu0 0.0
  %528 = vmatprep.subr.mxu0 0.0
  %529 = vmatpush2.msra.mxu0 0.0
  %530 = vmatprep.subr.mxu0 0.0
  %531 = vmatpush2.msra.mxu0 0.0
  %532 = vmatprep.subr.mxu0 0.0
  %533 = vmatpush2.msra.mxu0 0.0
  %534 = vmatprep.subr.mxu0 0.0
  %535 = vmatpush2.msra.mxu0 0.0
  %536 = vmatprep.subr.mxu0 0.0
  %537 = vmatpush2.msra.mxu0 0.0
  %538 = vmatprep.subr.mxu0 0.0
  %539 = vmatpush2.msra.mxu0 0.0
  %540 = vmatprep.subr.mxu0 0.0
  %541 = vmatpush2.msra.mxu0 0.0
  %542 = vmatprep.subr.mxu0 0.0
  %543 = vmatpush2.msra.mxu0 0.0
  %544 = vmatprep.subr.mxu0 0.0
  %545 = vmatpush2.msra.mxu0 0.0
  %546 = vmatprep.subr.mxu0 0.0
  %547 = vmatpush2.msra.mxu0 0.0
  %548 = vmatprep.mubr.f32.mxu0 0.0
  %549 = vmatmul.mubr.f32.gmra.mxu0 %v437
  %v550 = vpop.f32.mrf.mxu0
  %v551 = vadd.f32 0.0, %v550
  %v552 = vpop.f32.mrf.mxu0
  %553 = vmatprep.mubr.f32.mxu0 0.0
  %554 = vmatmul.mubr.f32.gmra.mxu0 %v440
  %v555 = vpop.f32.mrf.mxu0
  %v556 = vadd.f32 0.0, %v555
  %v557 = vpop.f32.mrf.mxu0
  %558 = vmatprep.mubr.f32.mxu0 0.0
  %559 = vmatmul.mubr.f32.gmra.mxu0 %v443
  %v560 = vpop.f32.mrf.mxu0
  %v561 = vadd.f32 0.0, %v560
  %v562 = vpop.f32.mrf.mxu0
  %563 = vmatprep.mubr.f32.mxu0 0.0
  %564 = vmatmul.mubr.f32.gmra.mxu0 %v446
  %v565 = vpop.f32.mrf.mxu0
  %v566 = vadd.f32 0.0, %v565
  %v567 = vpop.f32.mrf.mxu0
  %568 = vmatprep.mubr.f32.mxu0 0.0
  %569 = vmatmul.mubr.f32.gmra.mxu0 %v449
  %v570 = vpop.f32.mrf.mxu0
  %v571 = vadd.f32 0.0, %v570
  %v572 = vpop.f32.mrf.mxu0
  %573 = vmatprep.mubr.f32.mxu0 0.0
  %574 = vmatmul.mubr.f32.gmra.mxu0 %v452
  %v575 = vpop.f32.mrf.mxu0
  %v576 = vadd.f32 0.0, %v575
  %v577 = vpop.f32.mrf.mxu0
  %578 = vmatprep.mubr.f32.mxu0 0.0
  %579 = vmatmul.mubr.f32.gmra.mxu0 %v455
  %v580 = vpop.f32.mrf.mxu0
  %v581 = vadd.f32 0.0, %v580
  %v582 = vpop.f32.mrf.mxu0
  %583 = vmatprep.mubr.f32.mxu0 0.0
  %584 = vmatmul.mubr.f32.gmra.mxu0 %v458
  %v585 = vpop.f32.mrf.mxu0
  %v586 = vadd.f32 0.0, %v585
  %v587 = vpop.f32.mrf.mxu0
  %588 = vmatprep.mubr.f32.mxu0 0.0
  %589 = vmatmul.mubr.f32.gmra.mxu0 %v461
  %v590 = vpop.f32.mrf.mxu0
  %v591 = vadd.f32 0.0, %v590
  %v592 = vpop.f32.mrf.mxu0
  %593 = vmatprep.mubr.f32.mxu0 0.0
  %594 = vmatmul.mubr.f32.gmra.mxu0 %v464
  %v595 = vpop.f32.mrf.mxu0
  %v596 = vadd.f32 0.0, %v595
  %v597 = vpop.f32.mrf.mxu0
  %598 = vmatprep.mubr.f32.mxu0 0.0
  %599 = vmatmul.mubr.f32.gmra.mxu0 %v467
  %v600 = vpop.f32.mrf.mxu0
  %v601 = vadd.f32 0.0, %v600
  %v602 = vpop.f32.mrf.mxu0
  %603 = vmatprep.mubr.f32.mxu0 0.0
  %604 = vmatmul.mubr.f32.gmra.mxu0 %v470
  %v605 = vpop.f32.mrf.mxu0
  %v606 = vadd.f32 0.0, %v605
  %v607 = vpop.f32.mrf.mxu0
  %608 = vmatprep.mubr.f32.mxu0 0.0
  %609 = vmatmul.mubr.f32.gmra.mxu0 %v473
  %v610 = vpop.f32.mrf.mxu0
  %v611 = vadd.f32 0.0, %v610
  %v612 = vpop.f32.mrf.mxu0
  %613 = vmatprep.mubr.f32.mxu0 0.0
  %614 = vmatmul.mubr.f32.gmra.mxu0 %v476
  %v615 = vpop.f32.mrf.mxu0
  %v616 = vadd.f32 0.0, %v615
  %v617 = vpop.f32.mrf.mxu0
  %618 = vmatprep.mubr.f32.mxu0 0.0
  %619 = vmatmul.mubr.f32.gmra.mxu0 %v479
  %v620 = vpop.f32.mrf.mxu0
  %v621 = vadd.f32 0.0, %v620
  %v622 = vpop.f32.mrf.mxu0
  %623 = vmatprep.mubr.f32.mxu0 0.0
  %624 = vmatmul.mubr.f32.gmra.mxu0 %v482
  %v625 = vpop.f32.mrf.mxu0
  %v626 = vadd.f32 0.0, %v625
  %v627 = vpop.f32.mrf.mxu0
  %628 = vdwg.mxu0
  %v629 = vlaneseq
  %v630 = vshrl.u32 %v629, 7
  %v631 = vsub.s32 0, %v630
  %v632 = vrot.slane %v409, %v631
  %v633 = vadd.f32 %v551, %v632
  %v634 = vadd.f32 %v556, %v632
  %v635 = vadd.f32 %v561, %v632
  %v636 = vadd.f32 %v566, %v632
  %v637 = vadd.f32 %v571, %v632
  %v638 = vadd.f32 %v576, %v632
  %v639 = vadd.f32 %v581, %v632
  %v640 = vadd.f32 %v586, %v632
  %v641 = vadd.f32 %v591, %v632
  %v642 = vadd.f32 %v596, %v632
  %v643 = vadd.f32 %v601, %v632
  %v644 = vadd.f32 %v606, %v632
  %v645 = vadd.f32 %v611, %v632
  %v646 = vadd.f32 %v616, %v632
  %v647 = vadd.f32 %v621, %v632
  %v648 = vadd.f32 %v626, %v632
  %v649 = vmax.f32 %v633, 0.0
  %v650 = vmax.f32 %v634, 0.0
  %v651 = vmax.f32 %v635, 0.0
  %v652 = vmax.f32 %v636, 0.0
  %v653 = vmax.f32 %v637, 0.0
  %v654 = vmax.f32 %v638, 0.0
  %v655 = vmax.f32 %v639, 0.0
  %v656 = vmax.f32 %v640, 0.0
  %v657 = vmax.f32 %v641, 0.0
  %v658 = vmax.f32 %v642, 0.0
  %v659 = vmax.f32 %v643, 0.0
  %v660 = vmax.f32 %v644, 0.0
  %v661 = vmax.f32 %v645, 0.0
  %v662 = vmax.f32 %v646, 0.0
  %v663 = vmax.f32 %v647, 0.0
  %v664 = vmax.f32 %v648, 0.0
  %v665 = vlaneseq
  %v666 = vshrl.u32 %v665, 7
  %v667 = vsub.s32 1, %v666
  %v668 = vrot.slane %v409, %v667
  %v669 = vadd.f32 %v551, %v668
  %v670 = vadd.f32 %v556, %v668
  %v671 = vadd.f32 %v561, %v668
  %v672 = vadd.f32 %v566, %v668
  %v673 = vadd.f32 %v571, %v668
  %v674 = vadd.f32 %v576, %v668
  %v675 = vadd.f32 %v581, %v668
  %v676 = vadd.f32 %v586, %v668
  %v677 = vadd.f32 %v591, %v668
  %v678 = vadd.f32 %v596, %v668
  %v679 = vadd.f32 %v601, %v668
  %v680 = vadd.f32 %v606, %v668
  %v681 = vadd.f32 %v611, %v668
  %v682 = vadd.f32 %v616, %v668
  %v683 = vadd.f32 %v621, %v668
  %v684 = vadd.f32 %v626, %v668
  %v685 = vmax.f32 %v669, 0.0
  %v686 = vmax.f32 %v670, 0.0
  %v687 = vmax.f32 %v671, 0.0
  %v688 = vmax.f32 %v672, 0.0
  %v689 = vmax.f32 %v673, 0.0
  %v690 = vmax.f32 %v674, 0.0
  %v691 = vmax.f32 %v675, 0.0
  %v692 = vmax.f32 %v676, 0.0
  %v693 = vmax.f32 %v677, 0.0
  %v694 = vmax.f32 %v678, 0.0
  %v695 = vmax.f32 %v679, 0.0
  %v696 = vmax.f32 %v680, 0.0
  %v697 = vmax.f32 %v681, 0.0
  %v698 = vmax.f32 %v682, 0.0
  %v699 = vmax.f32 %v683, 0.0
  %v700 = vmax.f32 %v684, 0.0
  %v701 = vld [vmem:[%s11] sm:$0xff]
  %v702 = vld [vmem:[%s11 + $0x8] sm:$0xff]
  %v703 = vld [vmem:[%s11 + $0x10] sm:$0xff]
  %v704 = vld [vmem:[%s11 + $0x18] sm:$0xff]
  %v705 = vld [vmem:[%s11 + $0x20] sm:$0xff]
  %v706 = vld [vmem:[%s11 + $0x28] sm:$0xff]
  %v707 = vld [vmem:[%s11 + $0x30] sm:$0xff]
  %v708 = vld [vmem:[%s11 + $0x38] sm:$0xff]
  %v709 = vld [vmem:[%s11 + $0x40] sm:$0xff]
  %v710 = vld [vmem:[%s11 + $0x48] sm:$0xff]
  %v711 = vld [vmem:[%s11 + $0x50] sm:$0xff]
  %v712 = vld [vmem:[%s11 + $0x58] sm:$0xff]
  %v713 = vld [vmem:[%s11 + $0x60] sm:$0xff]
  %v714 = vld [vmem:[%s11 + $0x68] sm:$0xff]
  %v715 = vld [vmem:[%s11 + $0x70] sm:$0xff]
  %v716 = vld [vmem:[%s11 + $0x78] sm:$0xff]
  %v717 = vld [vmem:[%s12] sm:$0x1]
  %v719 = vlaneseq
  %v720 = vshrl.u32 %v719, 7
  %v721 = vsub.s32 0, %v720
  %v722 = vrot.slane %v717, %v721
  %724 = vmatprep.subr.mxu0 0.0
  %725 = vmatpush1.msra.mxu0 %v716
  %726 = vmatprep.subr.mxu0 0.0
  %727 = vmatpush1.msra.mxu0 %v715
  %728 = vmatprep.subr.mxu0 0.0
  %729 = vmatpush1.msra.mxu0 %v714
  %730 = vmatprep.subr.mxu0 0.0
  %731 = vmatpush1.msra.mxu0 %v713
  %732 = vmatprep.subr.mxu0 0.0
  %733 = vmatpush1.msra.mxu0 %v712
  %734 = vmatprep.subr.mxu0 0.0
  %735 = vmatpush1.msra.mxu0 %v711
  %736 = vmatprep.subr.mxu0 0.0
  %737 = vmatpush1.msra.mxu0 %v710
  %738 = vmatprep.subr.mxu0 0.0
  %739 = vmatpush1.msra.mxu0 %v709
  %740 = vmatprep.subr.mxu0 0.0
  %741 = vmatpush1.msra.mxu0 %v708
  %742 = vmatprep.subr.mxu0 0.0
  %743 = vmatpush1.msra.mxu0 %v707
  %744 = vmatprep.subr.mxu0 0.0
  %745 = vmatpush1.msra.mxu0 %v706
  %746 = vmatprep.subr.mxu0 0.0
  %747 = vmatpush1.msra.mxu0 %v705
  %748 = vmatprep.subr.mxu0 0.0
  %749 = vmatpush1.msra.mxu0 %v704
  %750 = vmatprep.subr.mxu0 0.0
  %751 = vmatpush1.msra.mxu0 %v703
  %752 = vmatprep.subr.mxu0 0.0
  %753 = vmatpush1.msra.mxu0 %v702
  %754 = vmatprep.subr.mxu0 0.0
  %755 = vmatpush1.msra.mxu0 %v701
  %756 = vmatprep.subr.mxu0 0.0
  %757 = vmatpush2.msra.mxu0 0.0
  %758 = vmatprep.subr.mxu0 0.0
  %759 = vmatpush2.msra.mxu0 0.0
  %760 = vmatprep.subr.mxu0 0.0
  %761 = vmatpush2.msra.mxu0 0.0
  %762 = vmatprep.subr.mxu0 0.0
  %763 = vmatpush2.msra.mxu0 0.0
  %764 = vmatprep.subr.mxu0 0.0
  %765 = vmatpush2.msra.mxu0 0.0
  %766 = vmatprep.subr.mxu0 0.0
  %767 = vmatpush2.msra.mxu0 0.0
  %768 = vmatprep.subr.mxu0 0.0
  %769 = vmatpush2.msra.mxu0 0.0
  %770 = vmatprep.subr.mxu0 0.0
  %771 = vmatpush2.msra.mxu0 0.0
  %772 = vmatprep.subr.mxu0 0.0
  %773 = vmatpush2.msra.mxu0 0.0
  %774 = vmatprep.subr.mxu0 0.0
  %775 = vmatpush2.msra.mxu0 0.0
  %776 = vmatprep.subr.mxu0 0.0
  %777 = vmatpush2.msra.mxu0 0.0
  %778 = vmatprep.subr.mxu0 0.0
  %779 = vmatpush2.msra.mxu0 0.0
  %780 = vmatprep.subr.mxu0 0.0
  %781 = vmatpush2.msra.mxu0 0.0
  %782 = vmatprep.subr.mxu0 0.0
  %783 = vmatpush2.msra.mxu0 0.0
  %784 = vmatprep.subr.mxu0 0.0
  %785 = vmatpush2.msra.mxu0 0.0
  %786 = vmatprep.subr.mxu0 0.0
  %787 = vmatpush2.msra.mxu0 0.0
  %788 = vmatprep.mubr.f32.mxu0 0.0
  %789 = vmatmul.mubr.f32.gmra.mxu0 %v649
  %v790 = vpop.f32.mrf.mxu0
  %v791 = vadd.f32 %v722, %v790
  %v792 = vpop.f32.mrf.mxu0
  %793 = vmatprep.mubr.f32.mxu0 0.0
  %794 = vmatmul.mubr.f32.gmra.mxu0 %v650
  %v795 = vpop.f32.mrf.mxu0
  %v796 = vadd.f32 %v722, %v795
  %v797 = vpop.f32.mrf.mxu0
  %798 = vmatprep.mubr.f32.mxu0 0.0
  %799 = vmatmul.mubr.f32.gmra.mxu0 %v651
  %v800 = vpop.f32.mrf.mxu0
  %v801 = vadd.f32 %v722, %v800
  %v802 = vpop.f32.mrf.mxu0
  %803 = vmatprep.mubr.f32.mxu0 0.0
  %804 = vmatmul.mubr.f32.gmra.mxu0 %v652
  %v805 = vpop.f32.mrf.mxu0
  %v806 = vadd.f32 %v722, %v805
  %v807 = vpop.f32.mrf.mxu0
  %808 = vmatprep.mubr.f32.mxu0 0.0
  %809 = vmatmul.mubr.f32.gmra.mxu0 %v653
  %v810 = vpop.f32.mrf.mxu0
  %v811 = vadd.f32 %v722, %v810
  %v812 = vpop.f32.mrf.mxu0
  %813 = vmatprep.mubr.f32.mxu0 0.0
  %814 = vmatmul.mubr.f32.gmra.mxu0 %v654
  %v815 = vpop.f32.mrf.mxu0
  %v816 = vadd.f32 %v722, %v815
  %v817 = vpop.f32.mrf.mxu0
  %818 = vmatprep.mubr.f32.mxu0 0.0
  %819 = vmatmul.mubr.f32.gmra.mxu0 %v655
  %v820 = vpop.f32.mrf.mxu0
  %v821 = vadd.f32 %v722, %v820
  %v822 = vpop.f32.mrf.mxu0
  %823 = vmatprep.mubr.f32.mxu0 0.0
  %824 = vmatmul.mubr.f32.gmra.mxu0 %v656
  %v825 = vpop.f32.mrf.mxu0
  %v826 = vadd.f32 %v722, %v825
  %v827 = vpop.f32.mrf.mxu0
  %828 = vmatprep.mubr.f32.mxu0 0.0
  %829 = vmatmul.mubr.f32.gmra.mxu0 %v657
  %v830 = vpop.f32.mrf.mxu0
  %v831 = vadd.f32 %v722, %v830
  %v832 = vpop.f32.mrf.mxu0
  %833 = vmatprep.mubr.f32.mxu0 0.0
  %834 = vmatmul.mubr.f32.gmra.mxu0 %v658
  %v835 = vpop.f32.mrf.mxu0
  %v836 = vadd.f32 %v722, %v835
  %v837 = vpop.f32.mrf.mxu0
  %838 = vmatprep.mubr.f32.mxu0 0.0
  %839 = vmatmul.mubr.f32.gmra.mxu0 %v659
  %v840 = vpop.f32.mrf.mxu0
  %v841 = vadd.f32 %v722, %v840
  %v842 = vpop.f32.mrf.mxu0
  %843 = vmatprep.mubr.f32.mxu0 0.0
  %844 = vmatmul.mubr.f32.gmra.mxu0 %v660
  %v845 = vpop.f32.mrf.mxu0
  %v846 = vadd.f32 %v722, %v845
  %v847 = vpop.f32.mrf.mxu0
  %848 = vmatprep.mubr.f32.mxu0 0.0
  %849 = vmatmul.mubr.f32.gmra.mxu0 %v661
  %v850 = vpop.f32.mrf.mxu0
  %v851 = vadd.f32 %v722, %v850
  %v852 = vpop.f32.mrf.mxu0
  %853 = vmatprep.mubr.f32.mxu0 0.0
  %854 = vmatmul.mubr.f32.gmra.mxu0 %v662
  %v855 = vpop.f32.mrf.mxu0
  %v856 = vadd.f32 %v722, %v855
  %v857 = vpop.f32.mrf.mxu0
  %858 = vmatprep.mubr.f32.mxu0 0.0
  %859 = vmatmul.mubr.f32.gmra.mxu0 %v663
  %v860 = vpop.f32.mrf.mxu0
  %v861 = vadd.f32 %v722, %v860
  %v862 = vpop.f32.mrf.mxu0
  %863 = vmatprep.mubr.f32.mxu0 0.0
  %864 = vmatmul.mubr.f32.gmra.mxu0 %v664
  %v865 = vpop.f32.mrf.mxu0
  %v866 = vadd.f32 %v722, %v865
  %v867 = vpop.f32.mrf.mxu0
  %868 = vmatprep.mubr.f32.mxu0 0.0
  %869 = vmatmul.mubr.f32.gmra.mxu0 %v685
  %v870 = vpop.f32.mrf.mxu0
  %v871 = vadd.f32 %v722, %v870
  %v872 = vpop.f32.mrf.mxu0
  %873 = vmatprep.mubr.f32.mxu0 0.0
  %874 = vmatmul.mubr.f32.gmra.mxu0 %v686
  %v875 = vpop.f32.mrf.mxu0
  %v876 = vadd.f32 %v722, %v875
  %v877 = vpop.f32.mrf.mxu0
  %878 = vmatprep.mubr.f32.mxu0 0.0
  %879 = vmatmul.mubr.f32.gmra.mxu0 %v687
  %v880 = vpop.f32.mrf.mxu0
  %v881 = vadd.f32 %v722, %v880
  %v882 = vpop.f32.mrf.mxu0
  %883 = vmatprep.mubr.f32.mxu0 0.0
  %884 = vmatmul.mubr.f32.gmra.mxu0 %v688
  %v885 = vpop.f32.mrf.mxu0
  %v886 = vadd.f32 %v722, %v885
  %v887 = vpop.f32.mrf.mxu0
  %888 = vmatprep.mubr.f32.mxu0 0.0
  %889 = vmatmul.mubr.f32.gmra.mxu0 %v689
  %v890 = vpop.f32.mrf.mxu0
  %v891 = vadd.f32 %v722, %v890
  %v892 = vpop.f32.mrf.mxu0
  %893 = vmatprep.mubr.f32.mxu0 0.0
  %894 = vmatmul.mubr.f32.gmra.mxu0 %v690
  %v895 = vpop.f32.mrf.mxu0
  %v896 = vadd.f32 %v722, %v895
  %v897 = vpop.f32.mrf.mxu0
  %898 = vmatprep.mubr.f32.mxu0 0.0
  %899 = vmatmul.mubr.f32.gmra.mxu0 %v691
  %v900 = vpop.f32.mrf.mxu0
  %v901 = vadd.f32 %v722, %v900
  %v902 = vpop.f32.mrf.mxu0
  %903 = vmatprep.mubr.f32.mxu0 0.0
  %904 = vmatmul.mubr.f32.gmra.mxu0 %v692
  %v905 = vpop.f32.mrf.mxu0
  %v906 = vadd.f32 %v722, %v905
  %v907 = vpop.f32.mrf.mxu0
  %908 = vmatprep.mubr.f32.mxu0 0.0
  %909 = vmatmul.mubr.f32.gmra.mxu0 %v693
  %v910 = vpop.f32.mrf.mxu0
  %v911 = vadd.f32 %v722, %v910
  %v912 = vpop.f32.mrf.mxu0
  %913 = vmatprep.mubr.f32.mxu0 0.0
  %914 = vmatmul.mubr.f32.gmra.mxu0 %v694
  %v915 = vpop.f32.mrf.mxu0
  %v916 = vadd.f32 %v722, %v915
  %v917 = vpop.f32.mrf.mxu0
  %918 = vmatprep.mubr.f32.mxu0 0.0
  %919 = vmatmul.mubr.f32.gmra.mxu0 %v695
  %v920 = vpop.f32.mrf.mxu0
  %v921 = vadd.f32 %v722, %v920
  %v922 = vpop.f32.mrf.mxu0
  %923 = vmatprep.mubr.f32.mxu0 0.0
  %924 = vmatmul.mubr.f32.gmra.mxu0 %v696
  %v925 = vpop.f32.mrf.mxu0
  %v926 = vadd.f32 %v722, %v925
  %v927 = vpop.f32.mrf.mxu0
  %928 = vmatprep.mubr.f32.mxu0 0.0
  %929 = vmatmul.mubr.f32.gmra.mxu0 %v697
  %v930 = vpop.f32.mrf.mxu0
  %v931 = vadd.f32 %v722, %v930
  %v932 = vpop.f32.mrf.mxu0
  %933 = vmatprep.mubr.f32.mxu0 0.0
  %934 = vmatmul.mubr.f32.gmra.mxu0 %v698
  %v935 = vpop.f32.mrf.mxu0
  %v936 = vadd.f32 %v722, %v935
  %v937 = vpop.f32.mrf.mxu0
  %938 = vmatprep.mubr.f32.mxu0 0.0
  %939 = vmatmul.mubr.f32.gmra.mxu0 %v699
  %v940 = vpop.f32.mrf.mxu0
  %v941 = vadd.f32 %v722, %v940
  %v942 = vpop.f32.mrf.mxu0
  %943 = vmatprep.mubr.f32.mxu0 0.0
  %944 = vmatmul.mubr.f32.gmra.mxu0 %v700
  %v945 = vpop.f32.mrf.mxu0
  %v946 = vadd.f32 %v722, %v945
  %v947 = vpop.f32.mrf.mxu0
  %948 = vdwg.mxu0
  %v949 = vmax.f32 %v791, 0.0
  %v950 = vmax.f32 %v796, 0.0
  %v951 = vmax.f32 %v801, 0.0
  %v952 = vmax.f32 %v806, 0.0
  %v953 = vmax.f32 %v811, 0.0
  %v954 = vmax.f32 %v816, 0.0
  %v955 = vmax.f32 %v821, 0.0
  %v956 = vmax.f32 %v826, 0.0
  %v957 = vmax.f32 %v831, 0.0
  %v958 = vmax.f32 %v836, 0.0
  %v959 = vmax.f32 %v841, 0.0
  %v960 = vmax.f32 %v846, 0.0
  %v961 = vmax.f32 %v851, 0.0
  %v962 = vmax.f32 %v856, 0.0
  %v963 = vmax.f32 %v861, 0.0
  %v964 = vmax.f32 %v866, 0.0
  %v965 = vmax.f32 %v871, 0.0
  %v966 = vmax.f32 %v876, 0.0
  %v967 = vmax.f32 %v881, 0.0
  %v968 = vmax.f32 %v886, 0.0
  %v969 = vmax.f32 %v891, 0.0
  %v970 = vmax.f32 %v896, 0.0
  %v971 = vmax.f32 %v901, 0.0
  %v972 = vmax.f32 %v906, 0.0
  %v973 = vmax.f32 %v911, 0.0
  %v974 = vmax.f32 %v916, 0.0
  %v975 = vmax.f32 %v921, 0.0
  %v976 = vmax.f32 %v926, 0.0
  %v977 = vmax.f32 %v931, 0.0
  %v978 = vmax.f32 %v936, 0.0
  %v979 = vmax.f32 %v941, 0.0
  %v980 = vmax.f32 %v946, 0.0
  %v981 = vadd.f32 %v949, %v649
  %v982 = vadd.f32 %v950, %v650
  %v983 = vadd.f32 %v951, %v651
  %v984 = vadd.f32 %v952, %v652
  %v985 = vadd.f32 %v953, %v653
  %v986 = vadd.f32 %v954, %v654
  %v987 = vadd.f32 %v955, %v655
  %v988 = vadd.f32 %v956, %v656
  %v989 = vadd.f32 %v957, %v657
  %v990 = vadd.f32 %v958, %v658
  %v991 = vadd.f32 %v959, %v659
  %v992 = vadd.f32 %v960, %v660
  %v993 = vadd.f32 %v961, %v661
  %v994 = vadd.f32 %v962, %v662
  %v995 = vadd.f32 %v963, %v663
  %v996 = vadd.f32 %v964, %v664
  %v997 = vadd.f32 %v965, %v685
  %v998 = vadd.f32 %v966, %v686
  %v999 = vadd.f32 %v967, %v687
  %v1000 = vadd.f32 %v968, %v688
  %v1001 = vadd.f32 %v969, %v689
  %v1002 = vadd.f32 %v970, %v690
  %v1003 = vadd.f32 %v971, %v691
  %v1004 = vadd.f32 %v972, %v692
  %v1005 = vadd.f32 %v973, %v693
  %v1006 = vadd.f32 %v974, %v694
  %v1007 = vadd.f32 %v975, %v695
  %v1008 = vadd.f32 %v976, %v696
  %v1009 = vadd.f32 %v977, %v697
  %v1010 = vadd.f32 %v978, %v698
  %v1011 = vadd.f32 %v979, %v699
  %v1012 = vadd.f32 %v980, %v700
  %v1013 = vld [vmem:[%s13] sm:$0xff]
  %v1014 = vld [vmem:[%s13 + $0x8] sm:$0xff]
  %v1015 = vld [vmem:[%s13 + $0x10] sm:$0xff]
  %v1016 = vld [vmem:[%s13 + $0x18] sm:$0xff]
  %v1017 = vld [vmem:[%s13 + $0x20] sm:$0xff]
  %v1018 = vld [vmem:[%s13 + $0x28] sm:$0xff]
  %v1019 = vld [vmem:[%s13 + $0x30] sm:$0xff]
  %v1020 = vld [vmem:[%s13 + $0x38] sm:$0xff]
  %v1021 = vld [vmem:[%s13 + $0x40] sm:$0xff]
  %v1022 = vld [vmem:[%s13 + $0x48] sm:$0xff]
  %v1023 = vld [vmem:[%s13 + $0x50] sm:$0xff]
  %v1024 = vld [vmem:[%s13 + $0x58] sm:$0xff]
  %v1025 = vld [vmem:[%s13 + $0x60] sm:$0xff]
  %v1026 = vld [vmem:[%s13 + $0x68] sm:$0xff]
  %v1027 = vld [vmem:[%s13 + $0x70] sm:$0xff]
  %v1028 = vld [vmem:[%s13 + $0x78] sm:$0xff]
  %v1029 = vld [vmem:[%s14] sm:$0x1]
  %v1031 = vlaneseq
  %v1032 = vshrl.u32 %v1031, 7
  %v1033 = vsub.s32 0, %v1032
  %v1034 = vrot.slane %v1029, %v1033
  %1036 = vmatprep.subr.mxu0 0.0
  %1037 = vmatpush1.msra.mxu0 %v1028
  %1038 = vmatprep.subr.mxu0 0.0
  %1039 = vmatpush1.msra.mxu0 %v1027
  %1040 = vmatprep.subr.mxu0 0.0
  %1041 = vmatpush1.msra.mxu0 %v1026
  %1042 = vmatprep.subr.mxu0 0.0
  %1043 = vmatpush1.msra.mxu0 %v1025
  %1044 = vmatprep.subr.mxu0 0.0
  %1045 = vmatpush1.msra.mxu0 %v1024
  %1046 = vmatprep.subr.mxu0 0.0
  %1047 = vmatpush1.msra.mxu0 %v1023
  %1048 = vmatprep.subr.mxu0 0.0
  %1049 = vmatpush1.msra.mxu0 %v1022
  %1050 = vmatprep.subr.mxu0 0.0
  %1051 = vmatpush1.msra.mxu0 %v1021
  %1052 = vmatprep.subr.mxu0 0.0
  %1053 = vmatpush1.msra.mxu0 %v1020
  %1054 = vmatprep.subr.mxu0 0.0
  %1055 = vmatpush1.msra.mxu0 %v1019
  %1056 = vmatprep.subr.mxu0 0.0
  %1057 = vmatpush1.msra.mxu0 %v1018
  %1058 = vmatprep.subr.mxu0 0.0
  %1059 = vmatpush1.msra.mxu0 %v1017
  %1060 = vmatprep.subr.mxu0 0.0
  %1061 = vmatpush1.msra.mxu0 %v1016
  %1062 = vmatprep.subr.mxu0 0.0
  %1063 = vmatpush1.msra.mxu0 %v1015
  %1064 = vmatprep.subr.mxu0 0.0
  %1065 = vmatpush1.msra.mxu0 %v1014
  %1066 = vmatprep.subr.mxu0 0.0
  %1067 = vmatpush1.msra.mxu0 %v1013
  %1068 = vmatprep.subr.mxu0 0.0
  %1069 = vmatpush2.msra.mxu0 0.0
  %1070 = vmatprep.subr.mxu0 0.0
  %1071 = vmatpush2.msra.mxu0 0.0
  %1072 = vmatprep.subr.mxu0 0.0
  %1073 = vmatpush2.msra.mxu0 0.0
  %1074 = vmatprep.subr.mxu0 0.0
  %1075 = vmatpush2.msra.mxu0 0.0
  %1076 = vmatprep.subr.mxu0 0.0
  %1077 = vmatpush2.msra.mxu0 0.0
  %1078 = vmatprep.subr.mxu0 0.0
  %1079 = vmatpush2.msra.mxu0 0.0
  %1080 = vmatprep.subr.mxu0 0.0
  %1081 = vmatpush2.msra.mxu0 0.0
  %1082 = vmatprep.subr.mxu0 0.0
  %1083 = vmatpush2.msra.mxu0 0.0
  %1084 = vmatprep.subr.mxu0 0.0
  %1085 = vmatpush2.msra.mxu0 0.0
  %1086 = vmatprep.subr.mxu0 0.0
  %1087 = vmatpush2.msra.mxu0 0.0
  %1088 = vmatprep.subr.mxu0 0.0
  %1089 = vmatpush2.msra.mxu0 0.0
  %1090 = vmatprep.subr.mxu0 0.0
  %1091 = vmatpush2.msra.mxu0 0.0
  %1092 = vmatprep.subr.mxu0 0.0
  %1093 = vmatpush2.msra.mxu0 0.0
  %1094 = vmatprep.subr.mxu0 0.0
  %1095 = vmatpush2.msra.mxu0 0.0
  %1096 = vmatprep.subr.mxu0 0.0
  %1097 = vmatpush2.msra.mxu0 0.0
  %1098 = vmatprep.subr.mxu0 0.0
  %1099 = vmatpush2.msra.mxu0 0.0
  %1100 = vmatprep.mubr.f32.mxu0 0.0
  %1101 = vmatmul.mubr.f32.gmra.mxu0 %v981
  %v1102 = vpop.f32.mrf.mxu0
  %v1103 = vadd.f32 %v1034, %v1102
  %v1104 = vpop.f32.mrf.mxu0
  %1105 = vmatprep.mubr.f32.mxu0 0.0
  %1106 = vmatmul.mubr.f32.gmra.mxu0 %v982
  %v1107 = vpop.f32.mrf.mxu0
  %v1108 = vadd.f32 %v1034, %v1107
  %v1109 = vpop.f32.mrf.mxu0
  %1110 = vmatprep.mubr.f32.mxu0 0.0
  %1111 = vmatmul.mubr.f32.gmra.mxu0 %v983
  %v1112 = vpop.f32.mrf.mxu0
  %v1113 = vadd.f32 %v1034, %v1112
  %v1114 = vpop.f32.mrf.mxu0
  %1115 = vmatprep.mubr.f32.mxu0 0.0
  %1116 = vmatmul.mubr.f32.gmra.mxu0 %v984
  %v1117 = vpop.f32.mrf.mxu0
  %v1118 = vadd.f32 %v1034, %v1117
  %v1119 = vpop.f32.mrf.mxu0
  %1120 = vmatprep.mubr.f32.mxu0 0.0
  %1121 = vmatmul.mubr.f32.gmra.mxu0 %v985
  %v1122 = vpop.f32.mrf.mxu0
  %v1123 = vadd.f32 %v1034, %v1122
  %v1124 = vpop.f32.mrf.mxu0
  %1125 = vmatprep.mubr.f32.mxu0 0.0
  %1126 = vmatmul.mubr.f32.gmra.mxu0 %v986
  %v1127 = vpop.f32.mrf.mxu0
  %v1128 = vadd.f32 %v1034, %v1127
  %v1129 = vpop.f32.mrf.mxu0
  %1130 = vmatprep.mubr.f32.mxu0 0.0
  %1131 = vmatmul.mubr.f32.gmra.mxu0 %v987
  %v1132 = vpop.f32.mrf.mxu0
  %v1133 = vadd.f32 %v1034, %v1132
  %v1134 = vpop.f32.mrf.mxu0
  %1135 = vmatprep.mubr.f32.mxu0 0.0
  %1136 = vmatmul.mubr.f32.gmra.mxu0 %v988
  %v1137 = vpop.f32.mrf.mxu0
  %v1138 = vadd.f32 %v1034, %v1137
  %v1139 = vpop.f32.mrf.mxu0
  %1140 = vmatprep.mubr.f32.mxu0 0.0
  %1141 = vmatmul.mubr.f32.gmra.mxu0 %v989
  %v1142 = vpop.f32.mrf.mxu0
  %v1143 = vadd.f32 %v1034, %v1142
  %v1144 = vpop.f32.mrf.mxu0
  %1145 = vmatprep.mubr.f32.mxu0 0.0
  %1146 = vmatmul.mubr.f32.gmra.mxu0 %v990
  %v1147 = vpop.f32.mrf.mxu0
  %v1148 = vadd.f32 %v1034, %v1147
  %v1149 = vpop.f32.mrf.mxu0
  %1150 = vmatprep.mubr.f32.mxu0 0.0
  %1151 = vmatmul.mubr.f32.gmra.mxu0 %v991
  %v1152 = vpop.f32.mrf.mxu0
  %v1153 = vadd.f32 %v1034, %v1152
  %v1154 = vpop.f32.mrf.mxu0
  %1155 = vmatprep.mubr.f32.mxu0 0.0
  %1156 = vmatmul.mubr.f32.gmra.mxu0 %v992
  %v1157 = vpop.f32.mrf.mxu0
  %v1158 = vadd.f32 %v1034, %v1157
  %v1159 = vpop.f32.mrf.mxu0
  %1160 = vmatprep.mubr.f32.mxu0 0.0
  %1161 = vmatmul.mubr.f32.gmra.mxu0 %v993
  %v1162 = vpop.f32.mrf.mxu0
  %v1163 = vadd.f32 %v1034, %v1162
  %v1164 = vpop.f32.mrf.mxu0
  %1165 = vmatprep.mubr.f32.mxu0 0.0
  %1166 = vmatmul.mubr.f32.gmra.mxu0 %v994
  %v1167 = vpop.f32.mrf.mxu0
  %v1168 = vadd.f32 %v1034, %v1167
  %v1169 = vpop.f32.mrf.mxu0
  %1170 = vmatprep.mubr.f32.mxu0 0.0
  %1171 = vmatmul.mubr.f32.gmra.mxu0 %v995
  %v1172 = vpop.f32.mrf.mxu0
  %v1173 = vadd.f32 %v1034, %v1172
  %v1174 = vpop.f32.mrf.mxu0
  %1175 = vmatprep.mubr.f32.mxu0 0.0
  %1176 = vmatmul.mubr.f32.gmra.mxu0 %v996
  %v1177 = vpop.f32.mrf.mxu0
  %v1178 = vadd.f32 %v1034, %v1177
  %v1179 = vpop.f32.mrf.mxu0
  %1180 = vmatprep.mubr.f32.mxu0 0.0
  %1181 = vmatmul.mubr.f32.gmra.mxu0 %v997
  %v1182 = vpop.f32.mrf.mxu0
  %v1183 = vadd.f32 %v1034, %v1182
  %v1184 = vpop.f32.mrf.mxu0
  %1185 = vmatprep.mubr.f32.mxu0 0.0
  %1186 = vmatmul.mubr.f32.gmra.mxu0 %v998
  %v1187 = vpop.f32.mrf.mxu0
  %v1188 = vadd.f32 %v1034, %v1187
  %v1189 = vpop.f32.mrf.mxu0
  %1190 = vmatprep.mubr.f32.mxu0 0.0
  %1191 = vmatmul.mubr.f32.gmra.mxu0 %v999
  %v1192 = vpop.f32.mrf.mxu0
  %v1193 = vadd.f32 %v1034, %v1192
  %v1194 = vpop.f32.mrf.mxu0
  %1195 = vmatprep.mubr.f32.mxu0 0.0
  %1196 = vmatmul.mubr.f32.gmra.mxu0 %v1000
  %v1197 = vpop.f32.mrf.mxu0
  %v1198 = vadd.f32 %v1034, %v1197
  %v1199 = vpop.f32.mrf.mxu0
  %1200 = vmatprep.mubr.f32.mxu0 0.0
  %1201 = vmatmul.mubr.f32.gmra.mxu0 %v1001
  %v1202 = vpop.f32.mrf.mxu0
  %v1203 = vadd.f32 %v1034, %v1202
  %v1204 = vpop.f32.mrf.mxu0
  %1205 = vmatprep.mubr.f32.mxu0 0.0
  %1206 = vmatmul.mubr.f32.gmra.mxu0 %v1002
  %v1207 = vpop.f32.mrf.mxu0
  %v1208 = vadd.f32 %v1034, %v1207
  %v1209 = vpop.f32.mrf.mxu0
  %1210 = vmatprep.mubr.f32.mxu0 0.0
  %1211 = vmatmul.mubr.f32.gmra.mxu0 %v1003
  %v1212 = vpop.f32.mrf.mxu0
  %v1213 = vadd.f32 %v1034, %v1212
  %v1214 = vpop.f32.mrf.mxu0
  %1215 = vmatprep.mubr.f32.mxu0 0.0
  %1216 = vmatmul.mubr.f32.gmra.mxu0 %v1004
  %v1217 = vpop.f32.mrf.mxu0
  %v1218 = vadd.f32 %v1034, %v1217
  %v1219 = vpop.f32.mrf.mxu0
  %1220 = vmatprep.mubr.f32.mxu0 0.0
  %1221 = vmatmul.mubr.f32.gmra.mxu0 %v1005
  %v1222 = vpop.f32.mrf.mxu0
  %v1223 = vadd.f32 %v1034, %v1222
  %v1224 = vpop.f32.mrf.mxu0
  %1225 = vmatprep.mubr.f32.mxu0 0.0
  %1226 = vmatmul.mubr.f32.gmra.mxu0 %v1006
  %v1227 = vpop.f32.mrf.mxu0
  %v1228 = vadd.f32 %v1034, %v1227
  %v1229 = vpop.f32.mrf.mxu0
  %1230 = vmatprep.mubr.f32.mxu0 0.0
  %1231 = vmatmul.mubr.f32.gmra.mxu0 %v1007
  %v1232 = vpop.f32.mrf.mxu0
  %v1233 = vadd.f32 %v1034, %v1232
  %v1234 = vpop.f32.mrf.mxu0
  %1235 = vmatprep.mubr.f32.mxu0 0.0
  %1236 = vmatmul.mubr.f32.gmra.mxu0 %v1008
  %v1237 = vpop.f32.mrf.mxu0
  %v1238 = vadd.f32 %v1034, %v1237
  %v1239 = vpop.f32.mrf.mxu0
  %1240 = vmatprep.mubr.f32.mxu0 0.0
  %1241 = vmatmul.mubr.f32.gmra.mxu0 %v1009
  %v1242 = vpop.f32.mrf.mxu0
  %v1243 = vadd.f32 %v1034, %v1242
  %v1244 = vpop.f32.mrf.mxu0
  %1245 = vmatprep.mubr.f32.mxu0 0.0
  %1246 = vmatmul.mubr.f32.gmra.mxu0 %v1010
  %v1247 = vpop.f32.mrf.mxu0
  %v1248 = vadd.f32 %v1034, %v1247
  %v1249 = vpop.f32.mrf.mxu0
  %1250 = vmatprep.mubr.f32.mxu0 0.0
  %1251 = vmatmul.mubr.f32.gmra.mxu0 %v1011
  %v1252 = vpop.f32.mrf.mxu0
  %v1253 = vadd.f32 %v1034, %v1252
  %v1254 = vpop.f32.mrf.mxu0
  %1255 = vmatprep.mubr.f32.mxu0 0.0
  %1256 = vmatmul.mubr.f32.gmra.mxu0 %v1012
  %v1257 = vpop.f32.mrf.mxu0
  %v1258 = vadd.f32 %v1034, %v1257
  %v1259 = vpop.f32.mrf.mxu0
  %1260 = vdwg.mxu0
  %v1261 = vmax.f32 %v1103, 0.0
  %v1262 = vmax.f32 %v1108, 0.0
  %v1263 = vmax.f32 %v1113, 0.0
  %v1264 = vmax.f32 %v1118, 0.0
  %v1265 = vmax.f32 %v1123, 0.0
  %v1266 = vmax.f32 %v1128, 0.0
  %v1267 = vmax.f32 %v1133, 0.0
  %v1268 = vmax.f32 %v1138, 0.0
  %v1269 = vmax.f32 %v1143, 0.0
  %v1270 = vmax.f32 %v1148, 0.0
  %v1271 = vmax.f32 %v1153, 0.0
  %v1272 = vmax.f32 %v1158, 0.0
  %v1273 = vmax.f32 %v1163, 0.0
  %v1274 = vmax.f32 %v1168, 0.0
  %v1275 = vmax.f32 %v1173, 0.0
  %v1276 = vmax.f32 %v1178, 0.0
  %v1277 = vmax.f32 %v1183, 0.0
  %v1278 = vmax.f32 %v1188, 0.0
  %v1279 = vmax.f32 %v1193, 0.0
  %v1280 = vmax.f32 %v1198, 0.0
  %v1281 = vmax.f32 %v1203, 0.0
  %v1282 = vmax.f32 %v1208, 0.0
  %v1283 = vmax.f32 %v1213, 0.0
  %v1284 = vmax.f32 %v1218, 0.0
  %v1285 = vmax.f32 %v1223, 0.0
  %v1286 = vmax.f32 %v1228, 0.0
  %v1287 = vmax.f32 %v1233, 0.0
  %v1288 = vmax.f32 %v1238, 0.0
  %v1289 = vmax.f32 %v1243, 0.0
  %v1290 = vmax.f32 %v1248, 0.0
  %v1291 = vmax.f32 %v1253, 0.0
  %v1292 = vmax.f32 %v1258, 0.0
  %v1293 = vadd.f32 %v1261, %v981
  %v1294 = vadd.f32 %v1262, %v982
  %v1295 = vadd.f32 %v1263, %v983
  %v1296 = vadd.f32 %v1264, %v984
  %v1297 = vadd.f32 %v1265, %v985
  %v1298 = vadd.f32 %v1266, %v986
  %v1299 = vadd.f32 %v1267, %v987
  %v1300 = vadd.f32 %v1268, %v988
  %v1301 = vadd.f32 %v1269, %v989
  %v1302 = vadd.f32 %v1270, %v990
  %v1303 = vadd.f32 %v1271, %v991
  %v1304 = vadd.f32 %v1272, %v992
  %v1305 = vadd.f32 %v1273, %v993
  %v1306 = vadd.f32 %v1274, %v994
  %v1307 = vadd.f32 %v1275, %v995
  %v1308 = vadd.f32 %v1276, %v996
  %v1309 = vadd.f32 %v1277, %v997
  %v1310 = vadd.f32 %v1278, %v998
  %v1311 = vadd.f32 %v1279, %v999
  %v1312 = vadd.f32 %v1280, %v1000
  %v1313 = vadd.f32 %v1281, %v1001
  %v1314 = vadd.f32 %v1282, %v1002
  %v1315 = vadd.f32 %v1283, %v1003
  %v1316 = vadd.f32 %v1284, %v1004
  %v1317 = vadd.f32 %v1285, %v1005
  %v1318 = vadd.f32 %v1286, %v1006
  %v1319 = vadd.f32 %v1287, %v1007
  %v1320 = vadd.f32 %v1288, %v1008
  %v1321 = vadd.f32 %v1289, %v1009
  %v1322 = vadd.f32 %v1290, %v1010
  %v1323 = vadd.f32 %v1291, %v1011
  %v1324 = vadd.f32 %v1292, %v1012
  %v1325 = vld [vmem:[%s15] sm:$0x3]
  %v1326 = vld [vmem:[%s16] sm:$0x3]
  %1328 = vset.pattern.permute.xlu0 0
  %1329 = vperm.xlu0 %1328, %v1326
  %v1330 = vpop.permute.xlu0 %1329
  %1332 = vmatprep.subr.mxu0 0.0
  %1333 = vmatpush1.xpose.msra.mxu0 %v1308
  %1334 = vmatprep.subr.mxu0 0.0
  %1335 = vmatpush1.xpose.msra.mxu0 %v1307
  %1336 = vmatprep.subr.mxu0 0.0
  %1337 = vmatpush1.xpose.msra.mxu0 %v1306
  %1338 = vmatprep.subr.mxu0 0.0
  %1339 = vmatpush1.xpose.msra.mxu0 %v1305
  %1340 = vmatprep.subr.mxu0 0.0
  %1341 = vmatpush1.xpose.msra.mxu0 %v1304
  %1342 = vmatprep.subr.mxu0 0.0
  %1343 = vmatpush1.xpose.msra.mxu0 %v1303
  %1344 = vmatprep.subr.mxu0 0.0
  %1345 = vmatpush1.xpose.msra.mxu0 %v1302
  %1346 = vmatprep.subr.mxu0 0.0
  %1347 = vmatpush1.xpose.msra.mxu0 %v1301
  %1348 = vmatprep.subr.mxu0 0.0
  %1349 = vmatpush1.xpose.msra.mxu0 %v1300
  %1350 = vmatprep.subr.mxu0 0.0
  %1351 = vmatpush1.xpose.msra.mxu0 %v1299
  %1352 = vmatprep.subr.mxu0 0.0
  %1353 = vmatpush1.xpose.msra.mxu0 %v1298
  %1354 = vmatprep.subr.mxu0 0.0
  %1355 = vmatpush1.xpose.msra.mxu0 %v1297
  %1356 = vmatprep.subr.mxu0 0.0
  %1357 = vmatpush1.xpose.msra.mxu0 %v1296
  %1358 = vmatprep.subr.mxu0 0.0
  %1359 = vmatpush1.xpose.msra.mxu0 %v1295
  %1360 = vmatprep.subr.mxu0 0.0
  %1361 = vmatpush1.xpose.msra.mxu0 %v1294
  %1362 = vmatprep.subr.mxu0 0.0
  %1363 = vmatpush1.xpose.msra.mxu0 %v1293
  %1364 = vmatprep.subr.mxu0 0.0
  %1365 = vmatpush2.xpose.msra.mxu0 %v1324
  %1366 = vmatprep.subr.mxu0 0.0
  %1367 = vmatpush2.xpose.msra.mxu0 %v1323
  %1368 = vmatprep.subr.mxu0 0.0
  %1369 = vmatpush2.xpose.msra.mxu0 %v1322
  %1370 = vmatprep.subr.mxu0 0.0
  %1371 = vmatpush2.xpose.msra.mxu0 %v1321
  %1372 = vmatprep.subr.mxu0 0.0
  %1373 = vmatpush2.xpose.msra.mxu0 %v1320
  %1374 = vmatprep.subr.mxu0 0.0
  %1375 = vmatpush2.xpose.msra.mxu0 %v1319
  %1376 = vmatprep.subr.mxu0 0.0
  %1377 = vmatpush2.xpose.msra.mxu0 %v1318
  %1378 = vmatprep.subr.mxu0 0.0
  %1379 = vmatpush2.xpose.msra.mxu0 %v1317
  %1380 = vmatprep.subr.mxu0 0.0
  %1381 = vmatpush2.xpose.msra.mxu0 %v1316
  %1382 = vmatprep.subr.mxu0 0.0
  %1383 = vmatpush2.xpose.msra.mxu0 %v1315
  %1384 = vmatprep.subr.mxu0 0.0
  %1385 = vmatpush2.xpose.msra.mxu0 %v1314
  %1386 = vmatprep.subr.mxu0 0.0
  %1387 = vmatpush2.xpose.msra.mxu0 %v1313
  %1388 = vmatprep.subr.mxu0 0.0
  %1389 = vmatpush2.xpose.msra.mxu0 %v1312
  %1390 = vmatprep.subr.mxu0 0.0
  %1391 = vmatpush2.xpose.msra.mxu0 %v1311
  %1392 = vmatprep.subr.mxu0 0.0
  %1393 = vmatpush2.xpose.msra.mxu0 %v1310
  %1394 = vmatprep.subr.mxu0 0.0
  %1395 = vmatpush2.xpose.msra.mxu0 %v1309
  %1396 = vmatprep.mubr.f32.mxu0 0.0
  %1397 = vmatmul.mubr.f32.gmra.mxu0 %v1325
  %v1398 = vpop.f32.mrf.mxu0
  %v1399 = vadd.f32 %v1330, %v1398
  %v1400 = vpop.f32.mrf.mxu0
  %v1401 = vadd.f32 %v1330, %v1400
  %1402 = vdwg.mxu0
  %v1405 = vcombine.low %v1399, %v1401
  %v1407 = vunpack.c.l.s4 1983009808
  %v1408 = vunpack.c.0.s8 %v1407
  %v1409 = vlaneseq
  %v1410 = vshrl.u32 %v1409, 7
  %v1411 = vsub.s32 %v1408, %v1410
  %v1412 = vrot.slane %v1405, %v1411
  %1414 = vst [vmem:[%s17] sm:$0xf] %v1412
  // Predicated region
  $region70: #{naf_forward.1} parent=0 // pred_check
    _
  $region71: #{naf_forward.1} parent=0 // pred_check_branch
    %1416 = sbr.rel (0) target = $region73
  $region72: #{naf_forward.1} parent=0 // pred_region
    _
  $region73: #{naf_forward.1} parent=0 // pred_fallthru
    _
  // Predicated region
  $region74: #{naf_forward.1} parent=0 // pred_check
    _
  $region75: #{naf_forward.1} parent=0 // pred_check_branch
    %1418 = sbr.rel (0) target = $region77
  $region76: #{naf_forward.1} parent=0 // pred_region
    _
  $region77: #{naf_forward.1} parent=0 // pred_fallthru
    _

</llo_original>
